<compile_context>
chip_gen: v5e
topology: v5e:2x2
jax: 0.10.0
libtpu: 0.0.40
codegen_flags: <defaults>
</compile_context>

<pallas_src>
import jax
import jax.numpy as jnp
from jax.experimental import pallas as pl
from jax.experimental.pallas import tpu as pltpu


def _entity_embed_kernel(x_ids_ref, ent_ids_ref,           # scalar prefetch (SMEM)
                         p1_idx_ref, p2_idx_ref,            # (TILE_L, 1) VMEM blocks
                         pos1_tab_ref, pos2_tab_ref,        # tiny tables, whole in VMEM
                         word_hbm,                          # (V, D) HBM-resident
                         xp_ref, xe_ref,                    # output tiles
                         xw_buf, ent_buf, sems):            # scratch
    b = pl.program_id(0)
    lt = pl.program_id(1)
    tile_l, d = xw_buf.shape
    seq_len = pl.num_programs(1) * tile_l
    tok0 = b * seq_len + lt * tile_l          # first flattened token of this tile

    # ---- issue word-row gathers: TILE_L token rows + 2 entity rows ---------
    def _start(r, carry):
        wid = x_ids_ref[tok0 + r]
        pltpu.make_async_copy(word_hbm.at[pl.ds(wid, 1), :],
                              xw_buf.at[pl.ds(r, 1), :],
                              sems.at[r]).start()
        return carry
    jax.lax.fori_loop(0, tile_l, _start, 0, unroll=True)

    e1 = ent_ids_ref[2 * b]
    e2 = ent_ids_ref[2 * b + 1]
    pltpu.make_async_copy(word_hbm.at[pl.ds(e1, 1), :],
                          ent_buf.at[pl.ds(0, 1), :], sems.at[tile_l]).start()
    pltpu.make_async_copy(word_hbm.at[pl.ds(e2, 1), :],
                          ent_buf.at[pl.ds(1, 1), :], sems.at[tile_l + 1]).start()

    # ---- position embeddings while the DMAs are in flight -------------------
    def onehot_gather(idx_col, tab):
        # Tables are tiny (n_pos x P); a one-hot matmul beats per-row DMAs here.
        n_rows = tab.shape[0]
        cols = jax.lax.broadcasted_iota(jnp.int32, (tile_l, n_rows), 1)
        onehot = (idx_col == cols).astype(tab.dtype)
        return jnp.dot(onehot, tab, preferred_element_type=jnp.float32)

    xp1 = onehot_gather(p1_idx_ref[...], pos1_tab_ref[...])   # (TILE_L, P)
    xp2 = onehot_gather(p2_idx_ref[...], pos2_tab_ref[...])   # (TILE_L, P)
    p = xp1.shape[1]

    # ---- wait for the gathers ------------------------------------------------
    def _wait(r, carry):
        pltpu.make_async_copy(word_hbm.at[pl.ds(0, 1), :],
                              xw_buf.at[pl.ds(r, 1), :],
                              sems.at[r]).wait()
        return carry
    jax.lax.fori_loop(0, tile_l, _wait, 0, unroll=True)
    pltpu.make_async_copy(word_hbm.at[pl.ds(0, 1), :],
                          ent_buf.at[pl.ds(0, 1), :], sems.at[tile_l]).wait()
    pltpu.make_async_copy(word_hbm.at[pl.ds(0, 1), :],
                          ent_buf.at[pl.ds(1, 1), :], sems.at[tile_l + 1]).wait()

    # ---- stores: straight into output sub-slices (no concat temps) ----------
    xw = xw_buf[...]                                          # (TILE_L, D)
    xp_ref[:, :d] = xw
    xp_ref[:, d:d + p] = xp1
    xp_ref[:, d + p:] = xp2

    xe_ref[:, :d] = xw
    xe_ref[:, d:2 * d] = jnp.broadcast_to(ent_buf[0:1, :], (tile_l, d))
    xe_ref[:, 2 * d:] = jnp.broadcast_to(ent_buf[1:2, :], (tile_l, d))


def _pick_tile(length, cap=128):
    """Largest tile <= cap dividing `length` that keeps sublane alignment."""
    best = 1
    for t in range(1, min(length, cap) + 1):
        if length % t == 0 and (t % 8 == 0 or t == length):
            best = t
    return best


def entity_aware_embedding(word_tab, pos1_tab, pos2_tab,
                           X, X_Pos1, X_Pos2, X_Ent1, X_Ent2):
    B, L = X.shape
    V, D = word_tab.shape
    n_pos, P = pos1_tab.shape
    tile_l = _pick_tile(L)
    n_lt = L // tile_l
    N = B * L

    word_tab = word_tab.astype(jnp.float32)
    pos1_tab = pos1_tab.astype(jnp.float32)
    pos2_tab = pos2_tab.astype(jnp.float32)

    # Clamp ids (OOB ids would otherwise be unchecked OOB DMAs).
    x_ids = jnp.clip(X.astype(jnp.int32), 0, V - 1).reshape(N)
    ent_ids = jnp.clip(jnp.stack([X_Ent1, X_Ent2], axis=1).astype(jnp.int32),
                       0, V - 1).reshape(2 * B)
    p1_col = jnp.clip(X_Pos1.astype(jnp.int32), 0, n_pos - 1).reshape(N, 1)
    p2_col = jnp.clip(X_Pos2.astype(jnp.int32), 0, n_pos - 1).reshape(N, 1)

    idx_map = lambda b, lt, xids, eids: (b * n_lt + lt, 0)
    idx_spec = pl.BlockSpec((tile_l, 1), idx_map)
    vmem_whole = pl.BlockSpec(memory_space=pltpu.MemorySpace.VMEM)
    hbm_spec = pl.BlockSpec(memory_space=pl.ANY)

    grid_spec = pltpu.PrefetchScalarGridSpec(
        num_scalar_prefetch=2,
        grid=(B, n_lt),
        in_specs=[idx_spec, idx_spec, vmem_whole, vmem_whole, hbm_spec],
        out_specs=(pl.BlockSpec((tile_l, D + 2 * P), idx_map),
                   pl.BlockSpec((tile_l, 3 * D), idx_map)),
        scratch_shapes=[
            pltpu.VMEM((tile_l, D), jnp.float32),        # gathered word rows
            pltpu.VMEM((2, D), jnp.float32),             # entity rows
            pltpu.SemaphoreType.DMA((tile_l + 2,)),      # one sem per row DMA
        ],
    )

    xp_flat, xe_flat = pl.pallas_call(
        _entity_embed_kernel,
        grid_spec=grid_spec,
        out_shape=(jax.ShapeDtypeStruct((N, D + 2 * P), jnp.float32),
                   jax.ShapeDtypeStruct((N, 3 * D), jnp.float32)),
        compiler_params=pltpu.CompilerParams(
            dimension_semantics=("parallel", "parallel"),
            vmem_limit_bytes=32 * 1024 * 1024,
        ),
    )(x_ids, ent_ids, p1_col, p2_col, pos1_tab, pos2_tab, word_tab)

    return (xp_flat.reshape(B, L, D + 2 * P),
            xe_flat.reshape(B, L, 3 * D))


if __name__ == "__main__":
    key = jax.random.PRNGKey(0)
    k_word, k_p1, k_p2, kx, kp1, kp2, ke1, ke2 = jax.random.split(key, 8)

    vocab, word_dim = 32, 16       # word_embedding table (pretrained -> random)
    pos_dim, pos_len = 5, 8        # module default pos_dim=5; small pos_len
    n_pos = 2 * pos_len + 1
    B, L = 2, 8

    word_tab = jax.random.normal(k_word, (vocab, word_dim), dtype=jnp.float32)
    # xavier_uniform_ for an (n_pos, pos_dim) weight
    bound = (6.0 / (n_pos + pos_dim)) ** 0.5
    pos1_tab = jax.random.uniform(k_p1, (n_pos, pos_dim), jnp.float32, -bound, bound)
    pos2_tab = jax.random.uniform(k_p2, (n_pos, pos_dim), jnp.float32, -bound, bound)

    X      = jax.random.randint(kx,  (B, L), 0, vocab, dtype=jnp.int32)
    X_Pos1 = jax.random.randint(kp1, (B, L), 0, n_pos, dtype=jnp.int32)
    X_Pos2 = jax.random.randint(kp2, (B, L), 0, n_pos, dtype=jnp.int32)
    X_Ent1 = jax.random.randint(ke1, (B,), 0, vocab, dtype=jnp.int32)
    X_Ent2 = jax.random.randint(ke2, (B,), 0, vocab, dtype=jnp.int32)

    Xp, Xe = entity_aware_embedding(word_tab, pos1_tab, pos2_tab,
                                    X, X_Pos1, X_Pos2, X_Ent1, X_Ent2)
    jax.block_until_ready((Xp, Xe))

    # pure-JAX reference check
    Xw_ref = word_tab[X]
    Xp_ref = jnp.concatenate([Xw_ref, pos1_tab[X_Pos1], pos2_tab[X_Pos2]], -1)
    E1 = jnp.broadcast_to(word_tab[X_Ent1][:, None, :], Xw_ref.shape)
    E2 = jnp.broadcast_to(word_tab[X_Ent2][:, None, :], Xw_ref.shape)
    Xe_ref = jnp.concatenate([Xw_ref, E1, E2], -1)

    assert Xp.shape == (B, L, word_dim + 2 * pos_dim)
    assert Xe.shape == (B, L, 3 * word_dim)
    assert jnp.allclose(Xp, Xp_ref, atol=1e-5)
    assert jnp.allclose(Xe, Xe_ref, atol=1e-5)
    print("KERNEL_OK")
</pallas_src>

<mosaic_0001>
module attributes {stable_mosaic.version = 11 : i64} {
  func.func @_entity_embed_kernel(%arg0: i32, %arg1: i32, %arg2: memref<16xi32, #tpu.memory_space<smem>>, %arg3: memref<4xi32, #tpu.memory_space<smem>>, %arg4: memref<8x1xi32, #tpu.memory_space<vmem>>, %arg5: memref<8x1xi32, #tpu.memory_space<vmem>>, %arg6: memref<17x5xf32, #tpu.memory_space<vmem>>, %arg7: memref<17x5xf32, #tpu.memory_space<vmem>>, %arg8: memref<32x16xf32, #tpu.memory_space<any>>, %arg9: memref<8x26xf32, #tpu.memory_space<vmem>>, %arg10: memref<8x48xf32, #tpu.memory_space<vmem>>, %arg11: memref<8x16xf32, #tpu.memory_space<vmem>>, %arg12: memref<2x16xf32, #tpu.memory_space<vmem>>, %arg13: memref<10x!tpu.dma_semaphore, #tpu.memory_space<semaphore_mem>>) attributes {dimension_semantics = [#tpu.dimension_semantics<parallel>, #tpu.dimension_semantics<parallel>], iteration_bounds = array<i64: 2, 1>, scalar_prefetch = 2 : i64, scratch_operands = 3 : i64, tpu.core_type = #tpu.core_type<tc>, window_params = [{transform_indices = @transform_0, window_bounds = array<i64: 8, 1>}, {transform_indices = @transform_1, window_bounds = array<i64: 8, 1>}, {pipeline_mode = #tpu.pipeline_mode<synchronous>, transform_indices = @transform_2, window_bounds = array<i64: 17, 5>}, {pipeline_mode = #tpu.pipeline_mode<synchronous>, transform_indices = @transform_3, window_bounds = array<i64: 17, 5>}, {}, {transform_indices = @transform_5, window_bounds = array<i64: 8, 26>}, {transform_indices = @transform_6, window_bounds = array<i64: 8, 48>}]} {
    %c8_i32 = arith.constant 8 : i32
    %0 = arith.muli %arg0, %c8_i32 : i32
    %c8_i32_0 = arith.constant 8 : i32
    %1 = arith.muli %arg1, %c8_i32_0 : i32
    %2 = arith.addi %0, %1 : i32
    %c0_i32 = arith.constant 0 : i32
    %3 = arith.addi %2, %c0_i32 : i32
    %4 = arith.index_cast %3 : i32 to index
    %5 = memref.load %arg2[%4] : memref<16xi32, #tpu.memory_space<smem>>
    %c0_i32_1 = arith.constant 0 : i32
    %6 = tpu.memref_slice %arg8[%5, %c0_i32_1] : memref<32x16xf32, #tpu.memory_space<any>> -> memref<1x16xf32, #tpu.memory_space<any>>
    %c0_i32_2 = arith.constant 0 : i32
    %7 = tpu.memref_slice %arg11[%c0_i32, %c0_i32_2] : memref<8x16xf32, #tpu.memory_space<vmem>> -> memref<1x16xf32, #tpu.memory_space<vmem>>
    %8 = tpu.memref_slice %arg13[%c0_i32] : memref<10x!tpu.dma_semaphore, #tpu.memory_space<semaphore_mem>> -> memref<1x!tpu.dma_semaphore, #tpu.memory_space<semaphore_mem>>
    %9 = tpu.memref_squeeze %8 : memref<1x!tpu.dma_semaphore, #tpu.memory_space<semaphore_mem>> -> memref<!tpu.dma_semaphore, #tpu.memory_space<semaphore_mem>>
    tpu.enqueue_dma source(%6 : memref<1x16xf32, #tpu.memory_space<any>>) target(%7 : memref<1x16xf32, #tpu.memory_space<vmem>>) target_semaphore(%9 : memref<!tpu.dma_semaphore, #tpu.memory_space<semaphore_mem>>)
    %c1_i32 = arith.constant 1 : i32
    %10 = arith.addi %2, %c1_i32 : i32
    %11 = arith.index_cast %10 : i32 to index
    %12 = memref.load %arg2[%11] : memref<16xi32, #tpu.memory_space<smem>>
    %c0_i32_3 = arith.constant 0 : i32
    %13 = tpu.memref_slice %arg8[%12, %c0_i32_3] : memref<32x16xf32, #tpu.memory_space<any>> -> memref<1x16xf32, #tpu.memory_space<any>>
    %c0_i32_4 = arith.constant 0 : i32
    %14 = tpu.memref_slice %arg11[%c1_i32, %c0_i32_4] : memref<8x16xf32, #tpu.memory_space<vmem>> -> memref<1x16xf32, #tpu.memory_space<vmem>>
    %15 = tpu.memref_slice %arg13[%c1_i32] : memref<10x!tpu.dma_semaphore, #tpu.memory_space<semaphore_mem>> -> memref<1x!tpu.dma_semaphore, #tpu.memory_space<semaphore_mem>>
    %16 = tpu.memref_squeeze %15 : memref<1x!tpu.dma_semaphore, #tpu.memory_space<semaphore_mem>> -> memref<!tpu.dma_semaphore, #tpu.memory_space<semaphore_mem>>
    tpu.enqueue_dma source(%13 : memref<1x16xf32, #tpu.memory_space<any>>) target(%14 : memref<1x16xf32, #tpu.memory_space<vmem>>) target_semaphore(%16 : memref<!tpu.dma_semaphore, #tpu.memory_space<semaphore_mem>>)
    %c2_i32 = arith.constant 2 : i32
    %17 = arith.addi %2, %c2_i32 : i32
    %18 = arith.index_cast %17 : i32 to index
    %19 = memref.load %arg2[%18] : memref<16xi32, #tpu.memory_space<smem>>
    %c0_i32_5 = arith.constant 0 : i32
    %20 = tpu.memref_slice %arg8[%19, %c0_i32_5] : memref<32x16xf32, #tpu.memory_space<any>> -> memref<1x16xf32, #tpu.memory_space<any>>
    %c0_i32_6 = arith.constant 0 : i32
    %21 = tpu.memref_slice %arg11[%c2_i32, %c0_i32_6] : memref<8x16xf32, #tpu.memory_space<vmem>> -> memref<1x16xf32, #tpu.memory_space<vmem>>
    %22 = tpu.memref_slice %arg13[%c2_i32] : memref<10x!tpu.dma_semaphore, #tpu.memory_space<semaphore_mem>> -> memref<1x!tpu.dma_semaphore, #tpu.memory_space<semaphore_mem>>
    %23 = tpu.memref_squeeze %22 : memref<1x!tpu.dma_semaphore, #tpu.memory_space<semaphore_mem>> -> memref<!tpu.dma_semaphore, #tpu.memory_space<semaphore_mem>>
    tpu.enqueue_dma source(%20 : memref<1x16xf32, #tpu.memory_space<any>>) target(%21 : memref<1x16xf32, #tpu.memory_space<vmem>>) target_semaphore(%23 : memref<!tpu.dma_semaphore, #tpu.memory_space<semaphore_mem>>)
    %c3_i32 = arith.constant 3 : i32
    %24 = arith.addi %2, %c3_i32 : i32
    %25 = arith.index_cast %24 : i32 to index
    %26 = memref.load %arg2[%25] : memref<16xi32, #tpu.memory_space<smem>>
    %c0_i32_7 = arith.constant 0 : i32
    %27 = tpu.memref_slice %arg8[%26, %c0_i32_7] : memref<32x16xf32, #tpu.memory_space<any>> -> memref<1x16xf32, #tpu.memory_space<any>>
    %c0_i32_8 = arith.constant 0 : i32
    %28 = tpu.memref_slice %arg11[%c3_i32, %c0_i32_8] : memref<8x16xf32, #tpu.memory_space<vmem>> -> memref<1x16xf32, #tpu.memory_space<vmem>>
    %29 = tpu.memref_slice %arg13[%c3_i32] : memref<10x!tpu.dma_semaphore, #tpu.memory_space<semaphore_mem>> -> memref<1x!tpu.dma_semaphore, #tpu.memory_space<semaphore_mem>>
    %30 = tpu.memref_squeeze %29 : memref<1x!tpu.dma_semaphore, #tpu.memory_space<semaphore_mem>> -> memref<!tpu.dma_semaphore, #tpu.memory_space<semaphore_mem>>
    tpu.enqueue_dma source(%27 : memref<1x16xf32, #tpu.memory_space<any>>) target(%28 : memref<1x16xf32, #tpu.memory_space<vmem>>) target_semaphore(%30 : memref<!tpu.dma_semaphore, #tpu.memory_space<semaphore_mem>>)
    %c4_i32 = arith.constant 4 : i32
    %31 = arith.addi %2, %c4_i32 : i32
    %32 = arith.index_cast %31 : i32 to index
    %33 = memref.load %arg2[%32] : memref<16xi32, #tpu.memory_space<smem>>
    %c0_i32_9 = arith.constant 0 : i32
    %34 = tpu.memref_slice %arg8[%33, %c0_i32_9] : memref<32x16xf32, #tpu.memory_space<any>> -> memref<1x16xf32, #tpu.memory_space<any>>
    %c0_i32_10 = arith.constant 0 : i32
    %35 = tpu.memref_slice %arg11[%c4_i32, %c0_i32_10] : memref<8x16xf32, #tpu.memory_space<vmem>> -> memref<1x16xf32, #tpu.memory_space<vmem>>
    %36 = tpu.memref_slice %arg13[%c4_i32] : memref<10x!tpu.dma_semaphore, #tpu.memory_space<semaphore_mem>> -> memref<1x!tpu.dma_semaphore, #tpu.memory_space<semaphore_mem>>
    %37 = tpu.memref_squeeze %36 : memref<1x!tpu.dma_semaphore, #tpu.memory_space<semaphore_mem>> -> memref<!tpu.dma_semaphore, #tpu.memory_space<semaphore_mem>>
    tpu.enqueue_dma source(%34 : memref<1x16xf32, #tpu.memory_space<any>>) target(%35 : memref<1x16xf32, #tpu.memory_space<vmem>>) target_semaphore(%37 : memref<!tpu.dma_semaphore, #tpu.memory_space<semaphore_mem>>)
    %c5_i32 = arith.constant 5 : i32
    %38 = arith.addi %2, %c5_i32 : i32
    %39 = arith.index_cast %38 : i32 to index
    %40 = memref.load %arg2[%39] : memref<16xi32, #tpu.memory_space<smem>>
    %c0_i32_11 = arith.constant 0 : i32
    %41 = tpu.memref_slice %arg8[%40, %c0_i32_11] : memref<32x16xf32, #tpu.memory_space<any>> -> memref<1x16xf32, #tpu.memory_space<any>>
    %c0_i32_12 = arith.constant 0 : i32
    %42 = tpu.memref_slice %arg11[%c5_i32, %c0_i32_12] : memref<8x16xf32, #tpu.memory_space<vmem>> -> memref<1x16xf32, #tpu.memory_space<vmem>>
    %43 = tpu.memref_slice %arg13[%c5_i32] : memref<10x!tpu.dma_semaphore, #tpu.memory_space<semaphore_mem>> -> memref<1x!tpu.dma_semaphore, #tpu.memory_space<semaphore_mem>>
    %44 = tpu.memref_squeeze %43 : memref<1x!tpu.dma_semaphore, #tpu.memory_space<semaphore_mem>> -> memref<!tpu.dma_semaphore, #tpu.memory_space<semaphore_mem>>
    tpu.enqueue_dma source(%41 : memref<1x16xf32, #tpu.memory_space<any>>) target(%42 : memref<1x16xf32, #tpu.memory_space<vmem>>) target_semaphore(%44 : memref<!tpu.dma_semaphore, #tpu.memory_space<semaphore_mem>>)
    %c6_i32 = arith.constant 6 : i32
    %45 = arith.addi %2, %c6_i32 : i32
    %46 = arith.index_cast %45 : i32 to index
    %47 = memref.load %arg2[%46] : memref<16xi32, #tpu.memory_space<smem>>
    %c0_i32_13 = arith.constant 0 : i32
    %48 = tpu.memref_slice %arg8[%47, %c0_i32_13] : memref<32x16xf32, #tpu.memory_space<any>> -> memref<1x16xf32, #tpu.memory_space<any>>
    %c0_i32_14 = arith.constant 0 : i32
    %49 = tpu.memref_slice %arg11[%c6_i32, %c0_i32_14] : memref<8x16xf32, #tpu.memory_space<vmem>> -> memref<1x16xf32, #tpu.memory_space<vmem>>
    %50 = tpu.memref_slice %arg13[%c6_i32] : memref<10x!tpu.dma_semaphore, #tpu.memory_space<semaphore_mem>> -> memref<1x!tpu.dma_semaphore, #tpu.memory_space<semaphore_mem>>
    %51 = tpu.memref_squeeze %50 : memref<1x!tpu.dma_semaphore, #tpu.memory_space<semaphore_mem>> -> memref<!tpu.dma_semaphore, #tpu.memory_space<semaphore_mem>>
    tpu.enqueue_dma source(%48 : memref<1x16xf32, #tpu.memory_space<any>>) target(%49 : memref<1x16xf32, #tpu.memory_space<vmem>>) target_semaphore(%51 : memref<!tpu.dma_semaphore, #tpu.memory_space<semaphore_mem>>)
    %c7_i32 = arith.constant 7 : i32
    %52 = arith.addi %2, %c7_i32 : i32
    %53 = arith.index_cast %52 : i32 to index
    %54 = memref.load %arg2[%53] : memref<16xi32, #tpu.memory_space<smem>>
    %c0_i32_15 = arith.constant 0 : i32
    %55 = tpu.memref_slice %arg8[%54, %c0_i32_15] : memref<32x16xf32, #tpu.memory_space<any>> -> memref<1x16xf32, #tpu.memory_space<any>>
    %c0_i32_16 = arith.constant 0 : i32
    %56 = tpu.memref_slice %arg11[%c7_i32, %c0_i32_16] : memref<8x16xf32, #tpu.memory_space<vmem>> -> memref<1x16xf32, #tpu.memory_space<vmem>>
    %57 = tpu.memref_slice %arg13[%c7_i32] : memref<10x!tpu.dma_semaphore, #tpu.memory_space<semaphore_mem>> -> memref<1x!tpu.dma_semaphore, #tpu.memory_space<semaphore_mem>>
    %58 = tpu.memref_squeeze %57 : memref<1x!tpu.dma_semaphore, #tpu.memory_space<semaphore_mem>> -> memref<!tpu.dma_semaphore, #tpu.memory_space<semaphore_mem>>
    tpu.enqueue_dma source(%55 : memref<1x16xf32, #tpu.memory_space<any>>) target(%56 : memref<1x16xf32, #tpu.memory_space<vmem>>) target_semaphore(%58 : memref<!tpu.dma_semaphore, #tpu.memory_space<semaphore_mem>>)
    %c8_i32_17 = arith.constant 8 : i32
    %c2_i32_18 = arith.constant 2 : i32
    %59 = arith.muli %c2_i32_18, %arg0 : i32
    %60 = arith.index_cast %59 : i32 to index
    %61 = memref.load %arg3[%60] : memref<4xi32, #tpu.memory_space<smem>>
    %c2_i32_19 = arith.constant 2 : i32
    %62 = arith.muli %c2_i32_19, %arg0 : i32
    %c1_i32_20 = arith.constant 1 : i32
    %63 = arith.addi %62, %c1_i32_20 : i32
    %64 = arith.index_cast %63 : i32 to index
    %65 = memref.load %arg3[%64] : memref<4xi32, #tpu.memory_space<smem>>
    %c8_i32_21 = arith.constant 8 : i32
    %c0_i32_22 = arith.constant 0 : i32
    %66 = tpu.memref_slice %arg8[%61, %c0_i32_22] : memref<32x16xf32, #tpu.memory_space<any>> -> memref<1x16xf32, #tpu.memory_space<any>>
    %c0_i32_23 = arith.constant 0 : i32
    %c0_i32_24 = arith.constant 0 : i32
    %67 = tpu.memref_slice %arg12[%c0_i32_23, %c0_i32_24] : memref<2x16xf32, #tpu.memory_space<vmem>> -> memref<1x16xf32, #tpu.memory_space<vmem>>
    %68 = tpu.memref_slice %arg13[%c8_i32_21] : memref<10x!tpu.dma_semaphore, #tpu.memory_space<semaphore_mem>> -> memref<1x!tpu.dma_semaphore, #tpu.memory_space<semaphore_mem>>
    %69 = tpu.memref_squeeze %68 : memref<1x!tpu.dma_semaphore, #tpu.memory_space<semaphore_mem>> -> memref<!tpu.dma_semaphore, #tpu.memory_space<semaphore_mem>>
    tpu.enqueue_dma source(%66 : memref<1x16xf32, #tpu.memory_space<any>>) target(%67 : memref<1x16xf32, #tpu.memory_space<vmem>>) target_semaphore(%69 : memref<!tpu.dma_semaphore, #tpu.memory_space<semaphore_mem>>)
    %c9_i32 = arith.constant 9 : i32
    %c0_i32_25 = arith.constant 0 : i32
    %70 = tpu.memref_slice %arg8[%65, %c0_i32_25] : memref<32x16xf32, #tpu.memory_space<any>> -> memref<1x16xf32, #tpu.memory_space<any>>
    %c1_i32_26 = arith.constant 1 : i32
    %c0_i32_27 = arith.constant 0 : i32
    %71 = tpu.memref_slice %arg12[%c1_i32_26, %c0_i32_27] : memref<2x16xf32, #tpu.memory_space<vmem>> -> memref<1x16xf32, #tpu.memory_space<vmem>>
    %72 = tpu.memref_slice %arg13[%c9_i32] : memref<10x!tpu.dma_semaphore, #tpu.memory_space<semaphore_mem>> -> memref<1x!tpu.dma_semaphore, #tpu.memory_space<semaphore_mem>>
    %73 = tpu.memref_squeeze %72 : memref<1x!tpu.dma_semaphore, #tpu.memory_space<semaphore_mem>> -> memref<!tpu.dma_semaphore, #tpu.memory_space<semaphore_mem>>
    tpu.enqueue_dma source(%70 : memref<1x16xf32, #tpu.memory_space<any>>) target(%71 : memref<1x16xf32, #tpu.memory_space<vmem>>) target_semaphore(%73 : memref<!tpu.dma_semaphore, #tpu.memory_space<semaphore_mem>>)
    %c0 = arith.constant 0 : index
    %c0_28 = arith.constant 0 : index
    %74 = vector.load %arg4[%c0, %c0_28] : memref<8x1xi32, #tpu.memory_space<vmem>>, vector<8x1xi32>
    %c0_29 = arith.constant 0 : index
    %c0_30 = arith.constant 0 : index
    %75 = vector.load %arg6[%c0_29, %c0_30] : memref<17x5xf32, #tpu.memory_space<vmem>>, vector<17x5xf32>
    %76 = tpu.iota {dimensions = array<i32: 1>} : vector<8x17xi32>
    %77 = vector.broadcast %74 : vector<8x1xi32> to vector<8x17xi32>
    %78 = arith.cmpi eq, %77, %76 : vector<8x17xi32>
    %79 = arith.extui %78 : vector<8x17xi1> to vector<8x17xi32>
    %80 = arith.sitofp %79 : vector<8x17xi32> to vector<8x17xf32>
    %cst = arith.constant dense<0.000000e+00> : vector<8x5xf32>
    %81 = tpu.matmul %80, %75, %cst {dimension_numbers = #tpu.dot_dimension_numbers<[1], [0], [0], [1], [0, 0, 1, 1], [], []>} : vector<8x17xf32>, vector<17x5xf32>, vector<8x5xf32> -> vector<8x5xf32>
    %c0_31 = arith.constant 0 : index
    %c0_32 = arith.constant 0 : index
    %82 = vector.load %arg5[%c0_31, %c0_32] : memref<8x1xi32, #tpu.memory_space<vmem>>, vector<8x1xi32>
    %c0_33 = arith.constant 0 : index
    %c0_34 = arith.constant 0 : index
    %83 = vector.load %arg7[%c0_33, %c0_34] : memref<17x5xf32, #tpu.memory_space<vmem>>, vector<17x5xf32>
    %84 = tpu.iota {dimensions = array<i32: 1>} : vector<8x17xi32>
    %85 = vector.broadcast %82 : vector<8x1xi32> to vector<8x17xi32>
    %86 = arith.cmpi eq, %85, %84 : vector<8x17xi32>
    %87 = arith.extui %86 : vector<8x17xi1> to vector<8x17xi32>
    %88 = arith.sitofp %87 : vector<8x17xi32> to vector<8x17xf32>
    %cst_35 = arith.constant dense<0.000000e+00> : vector<8x5xf32>
    %89 = tpu.matmul %88, %83, %cst_35 {dimension_numbers = #tpu.dot_dimension_numbers<[1], [0], [0], [1], [0, 0, 1, 1], [], []>} : vector<8x17xf32>, vector<17x5xf32>, vector<8x5xf32> -> vector<8x5xf32>
    %c0_i32_36 = arith.constant 0 : i32
    %c0_i32_37 = arith.constant 0 : i32
    %c0_i32_38 = arith.constant 0 : i32
    %90 = tpu.memref_slice %arg8[%c0_i32_37, %c0_i32_38] : memref<32x16xf32, #tpu.memory_space<any>> -> memref<1x16xf32, #tpu.memory_space<any>>
    %c0_i32_39 = arith.constant 0 : i32
    %91 = tpu.memref_slice %arg11[%c0_i32_36, %c0_i32_39] : memref<8x16xf32, #tpu.memory_space<vmem>> -> memref<1x16xf32, #tpu.memory_space<vmem>>
    %92 = tpu.memref_slice %arg13[%c0_i32_36] : memref<10x!tpu.dma_semaphore, #tpu.memory_space<semaphore_mem>> -> memref<1x!tpu.dma_semaphore, #tpu.memory_space<semaphore_mem>>
    %93 = tpu.memref_squeeze %92 : memref<1x!tpu.dma_semaphore, #tpu.memory_space<semaphore_mem>> -> memref<!tpu.dma_semaphore, #tpu.memory_space<semaphore_mem>>
    tpu.wait_dma2 semaphore(%93 : memref<!tpu.dma_semaphore, #tpu.memory_space<semaphore_mem>>) src(%90 : memref<1x16xf32, #tpu.memory_space<any>>) dst(%91 : memref<1x16xf32, #tpu.memory_space<vmem>>)
    %c1_i32_40 = arith.constant 1 : i32
    %c0_i32_41 = arith.constant 0 : i32
    %c0_i32_42 = arith.constant 0 : i32
    %94 = tpu.memref_slice %arg8[%c0_i32_41, %c0_i32_42] : memref<32x16xf32, #tpu.memory_space<any>> -> memref<1x16xf32, #tpu.memory_space<any>>
    %c0_i32_43 = arith.constant 0 : i32
    %95 = tpu.memref_slice %arg11[%c1_i32_40, %c0_i32_43] : memref<8x16xf32, #tpu.memory_space<vmem>> -> memref<1x16xf32, #tpu.memory_space<vmem>>
    %96 = tpu.memref_slice %arg13[%c1_i32_40] : memref<10x!tpu.dma_semaphore, #tpu.memory_space<semaphore_mem>> -> memref<1x!tpu.dma_semaphore, #tpu.memory_space<semaphore_mem>>
    %97 = tpu.memref_squeeze %96 : memref<1x!tpu.dma_semaphore, #tpu.memory_space<semaphore_mem>> -> memref<!tpu.dma_semaphore, #tpu.memory_space<semaphore_mem>>
    tpu.wait_dma2 semaphore(%97 : memref<!tpu.dma_semaphore, #tpu.memory_space<semaphore_mem>>) src(%94 : memref<1x16xf32, #tpu.memory_space<any>>) dst(%95 : memref<1x16xf32, #tpu.memory_space<vmem>>)
    %c2_i32_44 = arith.constant 2 : i32
    %c0_i32_45 = arith.constant 0 : i32
    %c0_i32_46 = arith.constant 0 : i32
    %98 = tpu.memref_slice %arg8[%c0_i32_45, %c0_i32_46] : memref<32x16xf32, #tpu.memory_space<any>> -> memref<1x16xf32, #tpu.memory_space<any>>
    %c0_i32_47 = arith.constant 0 : i32
    %99 = tpu.memref_slice %arg11[%c2_i32_44, %c0_i32_47] : memref<8x16xf32, #tpu.memory_space<vmem>> -> memref<1x16xf32, #tpu.memory_space<vmem>>
    %100 = tpu.memref_slice %arg13[%c2_i32_44] : memref<10x!tpu.dma_semaphore, #tpu.memory_space<semaphore_mem>> -> memref<1x!tpu.dma_semaphore, #tpu.memory_space<semaphore_mem>>
    %101 = tpu.memref_squeeze %100 : memref<1x!tpu.dma_semaphore, #tpu.memory_space<semaphore_mem>> -> memref<!tpu.dma_semaphore, #tpu.memory_space<semaphore_mem>>
    tpu.wait_dma2 semaphore(%101 : memref<!tpu.dma_semaphore, #tpu.memory_space<semaphore_mem>>) src(%98 : memref<1x16xf32, #tpu.memory_space<any>>) dst(%99 : memref<1x16xf32, #tpu.memory_space<vmem>>)
    %c3_i32_48 = arith.constant 3 : i32
    %c0_i32_49 = arith.constant 0 : i32
    %c0_i32_50 = arith.constant 0 : i32
    %102 = tpu.memref_slice %arg8[%c0_i32_49, %c0_i32_50] : memref<32x16xf32, #tpu.memory_space<any>> -> memref<1x16xf32, #tpu.memory_space<any>>
    %c0_i32_51 = arith.constant 0 : i32
    %103 = tpu.memref_slice %arg11[%c3_i32_48, %c0_i32_51] : memref<8x16xf32, #tpu.memory_space<vmem>> -> memref<1x16xf32, #tpu.memory_space<vmem>>
    %104 = tpu.memref_slice %arg13[%c3_i32_48] : memref<10x!tpu.dma_semaphore, #tpu.memory_space<semaphore_mem>> -> memref<1x!tpu.dma_semaphore, #tpu.memory_space<semaphore_mem>>
    %105 = tpu.memref_squeeze %104 : memref<1x!tpu.dma_semaphore, #tpu.memory_space<semaphore_mem>> -> memref<!tpu.dma_semaphore, #tpu.memory_space<semaphore_mem>>
    tpu.wait_dma2 semaphore(%105 : memref<!tpu.dma_semaphore, #tpu.memory_space<semaphore_mem>>) src(%102 : memref<1x16xf32, #tpu.memory_space<any>>) dst(%103 : memref<1x16xf32, #tpu.memory_space<vmem>>)
    %c4_i32_52 = arith.constant 4 : i32
    %c0_i32_53 = arith.constant 0 : i32
    %c0_i32_54 = arith.constant 0 : i32
    %106 = tpu.memref_slice %arg8[%c0_i32_53, %c0_i32_54] : memref<32x16xf32, #tpu.memory_space<any>> -> memref<1x16xf32, #tpu.memory_space<any>>
    %c0_i32_55 = arith.constant 0 : i32
    %107 = tpu.memref_slice %arg11[%c4_i32_52, %c0_i32_55] : memref<8x16xf32, #tpu.memory_space<vmem>> -> memref<1x16xf32, #tpu.memory_space<vmem>>
    %108 = tpu.memref_slice %arg13[%c4_i32_52] : memref<10x!tpu.dma_semaphore, #tpu.memory_space<semaphore_mem>> -> memref<1x!tpu.dma_semaphore, #tpu.memory_space<semaphore_mem>>
    %109 = tpu.memref_squeeze %108 : memref<1x!tpu.dma_semaphore, #tpu.memory_space<semaphore_mem>> -> memref<!tpu.dma_semaphore, #tpu.memory_space<semaphore_mem>>
    tpu.wait_dma2 semaphore(%109 : memref<!tpu.dma_semaphore, #tpu.memory_space<semaphore_mem>>) src(%106 : memref<1x16xf32, #tpu.memory_space<any>>) dst(%107 : memref<1x16xf32, #tpu.memory_space<vmem>>)
    %c5_i32_56 = arith.constant 5 : i32
    %c0_i32_57 = arith.constant 0 : i32
    %c0_i32_58 = arith.constant 0 : i32
    %110 = tpu.memref_slice %arg8[%c0_i32_57, %c0_i32_58] : memref<32x16xf32, #tpu.memory_space<any>> -> memref<1x16xf32, #tpu.memory_space<any>>
    %c0_i32_59 = arith.constant 0 : i32
    %111 = tpu.memref_slice %arg11[%c5_i32_56, %c0_i32_59] : memref<8x16xf32, #tpu.memory_space<vmem>> -> memref<1x16xf32, #tpu.memory_space<vmem>>
    %112 = tpu.memref_slice %arg13[%c5_i32_56] : memref<10x!tpu.dma_semaphore, #tpu.memory_space<semaphore_mem>> -> memref<1x!tpu.dma_semaphore, #tpu.memory_space<semaphore_mem>>
    %113 = tpu.memref_squeeze %112 : memref<1x!tpu.dma_semaphore, #tpu.memory_space<semaphore_mem>> -> memref<!tpu.dma_semaphore, #tpu.memory_space<semaphore_mem>>
    tpu.wait_dma2 semaphore(%113 : memref<!tpu.dma_semaphore, #tpu.memory_space<semaphore_mem>>) src(%110 : memref<1x16xf32, #tpu.memory_space<any>>) dst(%111 : memref<1x16xf32, #tpu.memory_space<vmem>>)
    %c6_i32_60 = arith.constant 6 : i32
    %c0_i32_61 = arith.constant 0 : i32
    %c0_i32_62 = arith.constant 0 : i32
    %114 = tpu.memref_slice %arg8[%c0_i32_61, %c0_i32_62] : memref<32x16xf32, #tpu.memory_space<any>> -> memref<1x16xf32, #tpu.memory_space<any>>
    %c0_i32_63 = arith.constant 0 : i32
    %115 = tpu.memref_slice %arg11[%c6_i32_60, %c0_i32_63] : memref<8x16xf32, #tpu.memory_space<vmem>> -> memref<1x16xf32, #tpu.memory_space<vmem>>
    %116 = tpu.memref_slice %arg13[%c6_i32_60] : memref<10x!tpu.dma_semaphore, #tpu.memory_space<semaphore_mem>> -> memref<1x!tpu.dma_semaphore, #tpu.memory_space<semaphore_mem>>
    %117 = tpu.memref_squeeze %116 : memref<1x!tpu.dma_semaphore, #tpu.memory_space<semaphore_mem>> -> memref<!tpu.dma_semaphore, #tpu.memory_space<semaphore_mem>>
    tpu.wait_dma2 semaphore(%117 : memref<!tpu.dma_semaphore, #tpu.memory_space<semaphore_mem>>) src(%114 : memref<1x16xf32, #tpu.memory_space<any>>) dst(%115 : memref<1x16xf32, #tpu.memory_space<vmem>>)
    %c7_i32_64 = arith.constant 7 : i32
    %c0_i32_65 = arith.constant 0 : i32
    %c0_i32_66 = arith.constant 0 : i32
    %118 = tpu.memref_slice %arg8[%c0_i32_65, %c0_i32_66] : memref<32x16xf32, #tpu.memory_space<any>> -> memref<1x16xf32, #tpu.memory_space<any>>
    %c0_i32_67 = arith.constant 0 : i32
    %119 = tpu.memref_slice %arg11[%c7_i32_64, %c0_i32_67] : memref<8x16xf32, #tpu.memory_space<vmem>> -> memref<1x16xf32, #tpu.memory_space<vmem>>
    %120 = tpu.memref_slice %arg13[%c7_i32_64] : memref<10x!tpu.dma_semaphore, #tpu.memory_space<semaphore_mem>> -> memref<1x!tpu.dma_semaphore, #tpu.memory_space<semaphore_mem>>
    %121 = tpu.memref_squeeze %120 : memref<1x!tpu.dma_semaphore, #tpu.memory_space<semaphore_mem>> -> memref<!tpu.dma_semaphore, #tpu.memory_space<semaphore_mem>>
    tpu.wait_dma2 semaphore(%121 : memref<!tpu.dma_semaphore, #tpu.memory_space<semaphore_mem>>) src(%118 : memref<1x16xf32, #tpu.memory_space<any>>) dst(%119 : memref<1x16xf32, #tpu.memory_space<vmem>>)
    %c8_i32_68 = arith.constant 8 : i32
    %c8_i32_69 = arith.constant 8 : i32
    %c0_i32_70 = arith.constant 0 : i32
    %c0_i32_71 = arith.constant 0 : i32
    %122 = tpu.memref_slice %arg8[%c0_i32_70, %c0_i32_71] : memref<32x16xf32, #tpu.memory_space<any>> -> memref<1x16xf32, #tpu.memory_space<any>>
    %c0_i32_72 = arith.constant 0 : i32
    %c0_i32_73 = arith.constant 0 : i32
    %123 = tpu.memref_slice %arg12[%c0_i32_72, %c0_i32_73] : memref<2x16xf32, #tpu.memory_space<vmem>> -> memref<1x16xf32, #tpu.memory_space<vmem>>
    %124 = tpu.memref_slice %arg13[%c8_i32_69] : memref<10x!tpu.dma_semaphore, #tpu.memory_space<semaphore_mem>> -> memref<1x!tpu.dma_semaphore, #tpu.memory_space<semaphore_mem>>
    %125 = tpu.memref_squeeze %124 : memref<1x!tpu.dma_semaphore, #tpu.memory_space<semaphore_mem>> -> memref<!tpu.dma_semaphore, #tpu.memory_space<semaphore_mem>>
    tpu.wait_dma2 semaphore(%125 : memref<!tpu.dma_semaphore, #tpu.memory_space<semaphore_mem>>) src(%122 : memref<1x16xf32, #tpu.memory_space<any>>) dst(%123 : memref<1x16xf32, #tpu.memory_space<vmem>>)
    %c9_i32_74 = arith.constant 9 : i32
    %c0_i32_75 = arith.constant 0 : i32
    %c0_i32_76 = arith.constant 0 : i32
    %126 = tpu.memref_slice %arg8[%c0_i32_75, %c0_i32_76] : memref<32x16xf32, #tpu.memory_space<any>> -> memref<1x16xf32, #tpu.memory_space<any>>
    %c1_i32_77 = arith.constant 1 : i32
    %c0_i32_78 = arith.constant 0 : i32
    %127 = tpu.memref_slice %arg12[%c1_i32_77, %c0_i32_78] : memref<2x16xf32, #tpu.memory_space<vmem>> -> memref<1x16xf32, #tpu.memory_space<vmem>>
    %128 = tpu.memref_slice %arg13[%c9_i32_74] : memref<10x!tpu.dma_semaphore, #tpu.memory_space<semaphore_mem>> -> memref<1x!tpu.dma_semaphore, #tpu.memory_space<semaphore_mem>>
    %129 = tpu.memref_squeeze %128 : memref<1x!tpu.dma_semaphore, #tpu.memory_space<semaphore_mem>> -> memref<!tpu.dma_semaphore, #tpu.memory_space<semaphore_mem>>
    tpu.wait_dma2 semaphore(%129 : memref<!tpu.dma_semaphore, #tpu.memory_space<semaphore_mem>>) src(%126 : memref<1x16xf32, #tpu.memory_space<any>>) dst(%127 : memref<1x16xf32, #tpu.memory_space<vmem>>)
    %c0_79 = arith.constant 0 : index
    %c0_80 = arith.constant 0 : index
    %130 = vector.load %arg11[%c0_79, %c0_80] : memref<8x16xf32, #tpu.memory_space<vmem>>, vector<8x16xf32>
    %c0_81 = arith.constant 0 : index
    %c0_82 = arith.constant 0 : index
    %131 = vector.load %arg9[%c0_81, %c0_82] : memref<8x26xf32, #tpu.memory_space<vmem>>, vector<8x16xf32>
    tpu.vector_store %arg9[%c0_81, %c0_82], %130 {strides = array<i32>} : memref<8x26xf32, #tpu.memory_space<vmem>>, vector<8x16xf32>,
    %c0_83 = arith.constant 0 : index
    %c16 = arith.constant 16 : index
    %132 = vector.load %arg9[%c0_83, %c16] : memref<8x26xf32, #tpu.memory_space<vmem>>, vector<8x5xf32>
    tpu.vector_store %arg9[%c0_83, %c16], %81 {strides = array<i32>} : memref<8x26xf32, #tpu.memory_space<vmem>>, vector<8x5xf32>,
    %c0_84 = arith.constant 0 : index
    %c21 = arith.constant 21 : index
    %133 = vector.load %arg9[%c0_84, %c21] : memref<8x26xf32, #tpu.memory_space<vmem>>, vector<8x5xf32>
    tpu.vector_store %arg9[%c0_84, %c21], %89 {strides = array<i32>} : memref<8x26xf32, #tpu.memory_space<vmem>>, vector<8x5xf32>,
    %c0_85 = arith.constant 0 : index
    %c0_86 = arith.constant 0 : index
    %134 = vector.load %arg10[%c0_85, %c0_86] : memref<8x48xf32, #tpu.memory_space<vmem>>, vector<8x16xf32>
    tpu.vector_store %arg10[%c0_85, %c0_86], %130 {strides = array<i32>} : memref<8x48xf32, #tpu.memory_space<vmem>>, vector<8x16xf32>,
    %c0_87 = arith.constant 0 : index
    %c0_88 = arith.constant 0 : index
    %135 = vector.load %arg12[%c0_87, %c0_88] : memref<2x16xf32, #tpu.memory_space<vmem>>, vector<1x16xf32>
    %136 = vector.shape_cast %135 : vector<1x16xf32> to vector<1x16xf32>
    %137 = vector.broadcast %136 : vector<1x16xf32> to vector<8x16xf32>
    %c0_89 = arith.constant 0 : index
    %c16_90 = arith.constant 16 : index
    %138 = vector.load %arg10[%c0_89, %c16_90] : memref<8x48xf32, #tpu.memory_space<vmem>>, vector<8x16xf32>
    tpu.vector_store %arg10[%c0_89, %c16_90], %137 {strides = array<i32>} : memref<8x48xf32, #tpu.memory_space<vmem>>, vector<8x16xf32>,
    %c1 = arith.constant 1 : index
    %c0_91 = arith.constant 0 : index
    %139 = vector.load %arg12[%c1, %c0_91] : memref<2x16xf32, #tpu.memory_space<vmem>>, vector<1x16xf32>
    %140 = vector.shape_cast %139 : vector<1x16xf32> to vector<1x16xf32>
    %141 = vector.broadcast %140 : vector<1x16xf32> to vector<8x16xf32>
    %c0_92 = arith.constant 0 : index
    %c32 = arith.constant 32 : index
    %142 = vector.load %arg10[%c0_92, %c32] : memref<8x48xf32, #tpu.memory_space<vmem>>, vector<8x16xf32>
    tpu.vector_store %arg10[%c0_92, %c32], %141 {strides = array<i32>} : memref<8x48xf32, #tpu.memory_space<vmem>>, vector<8x16xf32>,
    return
  }
  func.func @transform_0(%arg0: i32, %arg1: i32, %arg2: memref<16xi32, #tpu.memory_space<smem>>, %arg3: memref<4xi32, #tpu.memory_space<smem>>) -> (i32, i32) {
    %c1_i32 = arith.constant 1 : i32
    %0 = arith.muli %arg0, %c1_i32 : i32
    %1 = arith.addi %0, %arg1 : i32
    %c0_i32 = arith.constant 0 : i32
    %c0_i32_0 = arith.constant 0 : i32
    return %1, %c0_i32 : i32, i32
  }
  func.func @transform_1(%arg0: i32, %arg1: i32, %arg2: memref<16xi32, #tpu.memory_space<smem>>, %arg3: memref<4xi32, #tpu.memory_space<smem>>) -> (i32, i32) {
    %c1_i32 = arith.constant 1 : i32
    %0 = arith.muli %arg0, %c1_i32 : i32
    %1 = arith.addi %0, %arg1 : i32
    %c0_i32 = arith.constant 0 : i32
    %c0_i32_0 = arith.constant 0 : i32
    return %1, %c0_i32 : i32, i32
  }
  func.func @transform_2(%arg0: i32, %arg1: i32, %arg2: memref<16xi32, #tpu.memory_space<smem>>, %arg3: memref<4xi32, #tpu.memory_space<smem>>) -> (i32, i32) {
    %c0_i32 = arith.constant 0 : i32
    %c0_i32_0 = arith.constant 0 : i32
    %c0_i32_1 = arith.constant 0 : i32
    return %c0_i32, %c0_i32_0 : i32, i32
  }
  func.func @transform_3(%arg0: i32, %arg1: i32, %arg2: memref<16xi32, #tpu.memory_space<smem>>, %arg3: memref<4xi32, #tpu.memory_space<smem>>) -> (i32, i32) {
    %c0_i32 = arith.constant 0 : i32
    %c0_i32_0 = arith.constant 0 : i32
    %c0_i32_1 = arith.constant 0 : i32
    return %c0_i32, %c0_i32_0 : i32, i32
  }
  func.func @transform_5(%arg0: i32, %arg1: i32, %arg2: memref<16xi32, #tpu.memory_space<smem>>, %arg3: memref<4xi32, #tpu.memory_space<smem>>) -> (i32, i32) {
    %c1_i32 = arith.constant 1 : i32
    %0 = arith.muli %arg0, %c1_i32 : i32
    %1 = arith.addi %0, %arg1 : i32
    %c0_i32 = arith.constant 0 : i32
    %c0_i32_0 = arith.constant 0 : i32
    return %1, %c0_i32 : i32, i32
  }
  func.func @transform_6(%arg0: i32, %arg1: i32, %arg2: memref<16xi32, #tpu.memory_space<smem>>, %arg3: memref<4xi32, #tpu.memory_space<smem>>) -> (i32, i32) {
    %c1_i32 = arith.constant 1 : i32
    %0 = arith.muli %arg0, %c1_i32 : i32
    %1 = arith.addi %0, %arg1 : i32
    %c0_i32 = arith.constant 0 : i32
    %c0_i32_0 = arith.constant 0 : i32
    return %1, %c0_i32 : i32, i32
  }
}

</mosaic_0001>

<llo_original>
// kernel: tpu_custom_call.1
$region0: #{tpu_custom_call.1}
  #allocation0 [shape = 'u32[]', space=smem, size = 0x4, offset = 0x4, fixed_abs, tag = 'smem constant byte address 0x4 - core index']
  #allocation1 [shape = 'u32[72,128]{1,0:T(1,128)}', space=vmem, size = 0x9000, scoped, tag = 'internal scratch']
  #allocation2 [shape = 'f32[8,16]{1,0:T(8,128)}', space=vmem, size = 0x1000, scoped, tag = 'scratch operand']
  #allocation3 [shape = 'f32[2,16]{1,0:T(2,128)}', space=vmem, size = 0x400, scoped, tag = 'scratch operand']
  #allocation4 [shape = 's32[10]{0}', space=sflag, size = 0x28, scoped, tag = 'scratch operand']
  #allocation5 [shape = 's32[1]{0}', space=sflag, size = 0x4, scoped, tag = 'scoped memory for tpu_custom_call.1']
  #allocation6 [shape = 'u8[512]{0}', space=smem, size = 0x200, scoped, tag = 'prefetched SMEM operand 0']
  #allocation7 [shape = 'u8[512]{0}', space=smem, size = 0x200, scoped, tag = 'prefetched SMEM operand 1']
  #allocation12 [shape = 's32[]', space=sflag, size = 0x4, offset = 0, fixed_abs, tag = 'sflag constant byte address 0x0 - dummy sync flag']
  #allocation13 [shape = 's32[]', space=sflag, size = 0x4, offset = 0, fixed_abs, tag = 'sflag constant byte address 0x0 - dummy sync flag']
  #allocation14 [shape = 's32[]', space=sflag, size = 0x4, offset = 0, fixed_abs, tag = 'sflag constant byte address 0x0 - dummy sync flag']
  #allocation15 [shape = 's32[]', space=sflag, size = 0x4, offset = 0, fixed_abs, tag = 'sflag constant byte address 0x0 - dummy sync flag']
  #allocation16 [shape = 's32[]', space=sflag, size = 0x4, offset = 0, fixed_abs, tag = 'sflag constant byte address 0x0 - dummy sync flag']
  #allocation17 [shape = 's32[]', space=sflag, size = 0x4, offset = 0, fixed_abs, tag = 'sflag constant byte address 0x0 - dummy sync flag']
  #allocation18 [shape = 's32[]', space=sflag, size = 0x4, offset = 0, fixed_abs, tag = 'sflag constant byte address 0x0 - dummy sync flag']
  #allocation19 [shape = 's32[]', space=sflag, size = 0x4, offset = 0, fixed_abs, tag = 'sflag constant byte address 0x0 - dummy sync flag']
  #allocation20 [shape = 's32[]', space=sflag, size = 0x4, offset = 0, fixed_abs, tag = 'sflag constant byte address 0x0 - dummy sync flag']
  #allocation21 [shape = 's32[]', space=sflag, size = 0x4, offset = 0, fixed_abs, tag = 'sflag constant byte address 0x0 - dummy sync flag']
  %s0 = inlined_call_operand.vmem [shape: s32[16], index: 0, kind: input, shape index: {}]
  %s1 = inlined_call_operand.vmem [shape: s32[4], index: 1, kind: input, shape index: {}]
  %s2 = inlined_call_operand.vmem [shape: s32[16,1], index: 2, kind: input, shape index: {}]
  %s3 = inlined_call_operand.vmem [shape: s32[16,1], index: 3, kind: input, shape index: {}]
  %s4 = inlined_call_operand.vmem [shape: f32[17,5], index: 4, kind: input, shape index: {}]
  %s5 = inlined_call_operand.vmem [shape: f32[17,5], index: 5, kind: input, shape index: {}]
  %s6 = inlined_call_operand.vmem [shape: f32[32,16], index: 6, kind: input, shape index: {}]
  %s7 = inlined_call_operand.hbm [shape: f32[16,26], index: 7, kind: output, shape index: {0}]
  %s8 = inlined_call_operand.hbm [shape: f32[16,48], index: 8, kind: output, shape index: {1}]
  %9 = xla_tuple %s7, %s8
  %s10 = sld [smem:[#allocation0]]
  $region357: #{tpu_custom_call.1} parent=0
    _
  %s12 = ssub.s32 1, %s10
  %s13 = scalar_select 0, %s12, %s10
  %s15 = sshll.u32 %s0, 4
  %s16 = int_to_ptr.vmem [resolvable:$true] %s15
  %18 = dma.vmem_to_smem %s16, 16, [#allocation6], [#allocation5]
  %s20 = sshll.u32 %s1, 4
  %s21 = int_to_ptr.vmem [resolvable:$true] %s20
  %23 = dma.vmem_to_smem %s21, 16, [#allocation7], [#allocation5]
  %25 = dma.done [#allocation5], 32
  %26 = sfence
  $region1: #{tpu_custom_call.1} parent=0
    #allocation8 [shape = 'u8[8192]{0}', space=vmem, size = 0x2000, scoped, tag = 'output window, operand 0']
    #allocation9 [shape = 's32[2]{0}', space=sflag, size = 0x8, scoped, tag = 'scoped memory for tpu_custom_call.1']
    #allocation10 [shape = 'u8[8192]{0}', space=vmem, size = 0x2000, scoped, tag = 'output window, operand 1']
    #allocation11 [shape = 's32[2]{0}', space=sflag, size = 0x8, scoped, tag = 'scoped memory for tpu_custom_call.1']
    %27 = vsyncpa [#allocation9], 0
    %s28 = scalar_lea.sflag [#allocation9], 1
    %29 = vsyncpa %s28, 0
    %30 = vsyncpa [#allocation11], 0
    %s31 = scalar_lea.sflag [#allocation11], 1
    %32 = vsyncpa %s31, 0
    loop: start=0, step=1, limit=4
    $region2: #{tpu_custom_call.1} parent=1 // loop_pre_header
      _
    $region3: #{tpu_custom_call.1} parent=1 // loop_header
      %s34 = sphi 0, %s38
      %p35 = scmp.ge.s32.totalorder %s34, 4
      %s41 = sphi 0, %s53
      %s42 = sphi 0, %s49
      %s43 = sphi 0, %s41
      %s44 = sphi 0, %s42
      %s45 = sphi 0, %s43
      %s46 = sphi 0, %s44
      %s58 = sphi 0, %s60
      %s61 = sphi 0, %s58
      %s62 = sphi 0, %s61
      %s78 = sphi 0, %s62
      %s86 = sphi 0, %s88
      %s89 = sphi 0, %s86
      %s90 = sphi 0, %s89
      %s106 = sphi 0, %s90
      %s110 = sphi 0, %s110
      %s112 = sphi 0, %s110
      %s113 = sphi 0, %s112
      %s127 = sphi 0, %s113
      %s131 = sphi 0, %s131
      %s133 = sphi 0, %s131
      %s134 = sphi 0, %s133
      %s148 = sphi 0, %s134
      %s156 = sphi 0, %s158
      %s159 = sphi 0, %s156
      %s160 = sphi 0, %s159
      %s176 = sphi 0, %s160
      %s184 = sphi 0, %s186
      %s187 = sphi 0, %s184
      %s188 = sphi 0, %s187
      %s204 = sphi 0, %s188
    $region4: #{tpu_custom_call.1} parent=1 // loop_header_branch
      %37 = sbr.rel (%p35) target = $region8
    $region5: #{tpu_custom_call.1} parent=1 // loop_body
      %s39 = ssub.s32 %s34, 1
      %s40 = ssub.s32 %s34, 2
      %s47 = sadd.s32 1, %s42
      %p48 = scmp.ge.s32.totalorder %s47, 1
      %s49 = scalar_select %p48, 0, %s47
      %s50 = sadd.s32 1, %s41
      %s51 = scalar_select %p48, %s50, %s41
      %p52 = scmp.ge.s32.totalorder %s51, 2
      %s53 = scalar_select %p52, 0, %s51
      %s54 = sadd.s32 %s41, %s42
      %s55 = sadd.s32 %s53, %s49
      %s56 = ssub.s32 %s54, %s55
      %p57 = scmp.eq.s32.totalorder %s56, 0
      %s59 = sadd.s32 %s58, 1
      %s60 = scalar_select %p57, %s58, %s59
      %p63 = pneg %p57
      %p64 = scmp.eq.s32.totalorder %s34, 1
      %p65 = por %p63, %p64
      %p66 = scmp.ne.s32.totalorder %s58, %s61
      %p67 = scmp.eq.s32.totalorder %s34, 0
      %p68 = por %p66, %p67
      %p69 = scmp.ne.s32.totalorder %s58, %s61
      %p70 = scmp.eq.s32.totalorder %s39, 1
      %p71 = por %p69, %p70
      %p72 = scmp.ne.s32.totalorder %s61, %s62
      %p73 = scmp.eq.s32.totalorder %s39, 0
      %p74 = por %p72, %p73
      %p75 = scmp.ne.s32.totalorder %s61, %s62
      %p76 = scmp.eq.s32.totalorder %s40, 1
      %p77 = por %p75, %p76
      %p79 = scmp.ne.s32.totalorder %s62, %s78
      %p80 = scmp.eq.s32.totalorder %s40, 0
      %p81 = por %p79, %p80
      %s82 = sadd.s32 %s41, %s42
      %s83 = sadd.s32 %s53, %s49
      %s84 = ssub.s32 %s82, %s83
      %p85 = scmp.eq.s32.totalorder %s84, 0
      %s87 = sadd.s32 %s86, 1
      %s88 = scalar_select %p85, %s86, %s87
      %p91 = pneg %p85
      %p92 = scmp.eq.s32.totalorder %s34, 1
      %p93 = por %p91, %p92
      %p94 = scmp.ne.s32.totalorder %s86, %s89
      %p95 = scmp.eq.s32.totalorder %s34, 0
      %p96 = por %p94, %p95
      %p97 = scmp.ne.s32.totalorder %s86, %s89
      %p98 = scmp.eq.s32.totalorder %s39, 1
      %p99 = por %p97, %p98
      %p100 = scmp.ne.s32.totalorder %s89, %s90
      %p101 = scmp.eq.s32.totalorder %s39, 0
      %p102 = por %p100, %p101
      %p103 = scmp.ne.s32.totalorder %s89, %s90
      %p104 = scmp.eq.s32.totalorder %s40, 1
      %p105 = por %p103, %p104
      %p107 = scmp.ne.s32.totalorder %s90, %s106
      %p108 = scmp.eq.s32.totalorder %s40, 0
      %p109 = por %p107, %p108
      %s111 = sadd.s32 %s110, 1
      %p114 = scmp.eq.s32.totalorder %s34, 1
      %p115 = scmp.ne.s32.totalorder %s110, %s112
      %p116 = scmp.eq.s32.totalorder %s34, 0
      %p117 = por %p115, %p116
      %p118 = scmp.ne.s32.totalorder %s110, %s112
      %p119 = scmp.eq.s32.totalorder %s39, 1
      %p120 = por %p118, %p119
      %p121 = scmp.ne.s32.totalorder %s112, %s113
      %p122 = scmp.eq.s32.totalorder %s39, 0
      %p123 = por %p121, %p122
      %p124 = scmp.ne.s32.totalorder %s112, %s113
      %p125 = scmp.eq.s32.totalorder %s40, 1
      %p126 = por %p124, %p125
      %p128 = scmp.ne.s32.totalorder %s113, %s127
      %p129 = scmp.eq.s32.totalorder %s40, 0
      %p130 = por %p128, %p129
      %s132 = sadd.s32 %s131, 1
      %p135 = scmp.eq.s32.totalorder %s34, 1
      %p136 = scmp.ne.s32.totalorder %s131, %s133
      %p137 = scmp.eq.s32.totalorder %s34, 0
      %p138 = por %p136, %p137
      %p139 = scmp.ne.s32.totalorder %s131, %s133
      %p140 = scmp.eq.s32.totalorder %s39, 1
      %p141 = por %p139, %p140
      %p142 = scmp.ne.s32.totalorder %s133, %s134
      %p143 = scmp.eq.s32.totalorder %s39, 0
      %p144 = por %p142, %p143
      %p145 = scmp.ne.s32.totalorder %s133, %s134
      %p146 = scmp.eq.s32.totalorder %s40, 1
      %p147 = por %p145, %p146
      %p149 = scmp.ne.s32.totalorder %s134, %s148
      %p150 = scmp.eq.s32.totalorder %s40, 0
      %p151 = por %p149, %p150
      %s152 = sadd.s32 %s41, %s42
      %s153 = sadd.s32 %s53, %s49
      %s154 = ssub.s32 %s152, %s153
      %p155 = scmp.eq.s32.totalorder %s154, 0
      %s157 = sadd.s32 %s156, 1
      %s158 = scalar_select %p155, %s156, %s157
      %p161 = pneg %p155
      %p162 = scmp.eq.s32.totalorder %s34, 1
      %p163 = por %p161, %p162
      %p164 = scmp.ne.s32.totalorder %s156, %s159
      %p165 = scmp.eq.s32.totalorder %s34, 0
      %p166 = por %p164, %p165
      %p167 = scmp.ne.s32.totalorder %s156, %s159
      %p168 = scmp.eq.s32.totalorder %s39, 1
      %p169 = por %p167, %p168
      %p170 = scmp.ne.s32.totalorder %s159, %s160
      %p171 = scmp.eq.s32.totalorder %s39, 0
      %p172 = por %p170, %p171
      %p173 = scmp.ne.s32.totalorder %s159, %s160
      %p174 = scmp.eq.s32.totalorder %s40, 1
      %p175 = por %p173, %p174
      %p177 = scmp.ne.s32.totalorder %s160, %s176
      %p178 = scmp.eq.s32.totalorder %s40, 0
      %p179 = por %p177, %p178
      %s180 = sadd.s32 %s41, %s42
      %s181 = sadd.s32 %s53, %s49
      %s182 = ssub.s32 %s180, %s181
      %p183 = scmp.eq.s32.totalorder %s182, 0
      %s185 = sadd.s32 %s184, 1
      %s186 = scalar_select %p183, %s184, %s185
      %p189 = pneg %p183
      %p190 = scmp.eq.s32.totalorder %s34, 1
      %p191 = por %p189, %p190
      %p192 = scmp.ne.s32.totalorder %s184, %s187
      %p193 = scmp.eq.s32.totalorder %s34, 0
      %p194 = por %p192, %p193
      %p195 = scmp.ne.s32.totalorder %s184, %s187
      %p196 = scmp.eq.s32.totalorder %s39, 1
      %p197 = por %p195, %p196
      %p198 = scmp.ne.s32.totalorder %s187, %s188
      %p199 = scmp.eq.s32.totalorder %s39, 0
      %p200 = por %p198, %p199
      %p201 = scmp.ne.s32.totalorder %s187, %s188
      %p202 = scmp.eq.s32.totalorder %s40, 1
      %p203 = por %p201, %p202
      %p205 = scmp.ne.s32.totalorder %s188, %s204
      %p206 = scmp.eq.s32.totalorder %s40, 0
      %p207 = por %p205, %p206
      %p208 = scmp.le.s32.totalorder 1, %s34
      %p209 = scmp.lt.s32.totalorder %s34, 3
      %p210 = pnand %p208, %p209
      %p211 = pneg %p210
      // Predicated region
      $region9: #{tpu_custom_call.1} parent=5 // pred_check
        _
      $region10: #{tpu_custom_call.1} parent=5 // pred_check_branch
        %213 = sbr.rel (%p210) target = $region12
      $region11: #{tpu_custom_call.1} parent=5 // pred_region
        %s214 = ssub.s32 %s34, 1
        // Predicated region
        $region13: #{tpu_custom_call.1} parent=11 // pred_check
          %p215 = pneg %p123
        $region14: #{tpu_custom_call.1} parent=11 // pred_check_branch
          %217 = sbr.rel (%p215) target = $region16
        $region15: #{tpu_custom_call.1} parent=11 // pred_region
          _
        $region16: #{tpu_custom_call.1} parent=11 // pred_fallthru
          _
        // Predicated region
        $region17: #{tpu_custom_call.1} parent=11 // pred_check
          %p218 = pneg %p144
        $region18: #{tpu_custom_call.1} parent=11 // pred_check_branch
          %220 = sbr.rel (%p218) target = $region20
        $region19: #{tpu_custom_call.1} parent=11 // pred_region
          _
        $region20: #{tpu_custom_call.1} parent=11 // pred_fallthru
          _
      $region12: #{tpu_custom_call.1} parent=5 // pred_fallthru
        _
      %p221 = scmp.lt.s32.totalorder %s34, 2
      // Predicated region
      $region21: #{tpu_custom_call.1} parent=5 // pred_check
        %p222 = pneg %p221
      $region22: #{tpu_custom_call.1} parent=5 // pred_check_branch
        %224 = sbr.rel (%p222) target = $region24
      $region23: #{tpu_custom_call.1} parent=5 // pred_region
        // Predicated region
        $region25: #{tpu_custom_call.1} parent=23 // pred_check
          %p225 = pneg %p68
        $region26: #{tpu_custom_call.1} parent=23 // pred_check_branch
          %227 = sbr.rel (%p225) target = $region28
        $region27: #{tpu_custom_call.1} parent=23 // pred_region
          %s228 = sadd.s32 %s41, %s42
          %p229 = scmp.lt.s32.totalorder %s228, 1
          %s230 = scalar_select %p229, %s228, 1
          %s231 = smul.addr %s230, 8
          %s232 = scalar_lea.vmem %s2, %s231
          %s233 = sadd.s32 %s41, %s42
        $region28: #{tpu_custom_call.1} parent=23 // pred_fallthru
          _
        // Predicated region
        $region29: #{tpu_custom_call.1} parent=23 // pred_check
          %p234 = pneg %p96
        $region30: #{tpu_custom_call.1} parent=23 // pred_check_branch
          %236 = sbr.rel (%p234) target = $region32
        $region31: #{tpu_custom_call.1} parent=23 // pred_region
          %s237 = sadd.s32 %s41, %s42
          %p238 = scmp.lt.s32.totalorder %s237, 1
          %s239 = scalar_select %p238, %s237, 1
          %s240 = smul.addr %s239, 8
          %s241 = scalar_lea.vmem %s3, %s240
          %s242 = sadd.s32 %s41, %s42
        $region32: #{tpu_custom_call.1} parent=23 // pred_fallthru
          _
      $region24: #{tpu_custom_call.1} parent=5 // pred_fallthru
        _
      %p243 = scmp.le.s32.totalorder 1, %s34
      %p244 = scmp.lt.s32.totalorder %s34, 3
      %p245 = pnand %p243, %p244
      %p246 = pneg %p245
      // Predicated region
      $region33: #{tpu_custom_call.1} parent=5 // pred_check
        _
      $region34: #{tpu_custom_call.1} parent=5 // pred_check_branch
        %248 = sbr.rel (%p245) target = $region36
      $region35: #{tpu_custom_call.1} parent=5 // pred_region
        %s249 = ssub.s32 %s34, 1
        %s250 = sadd.s32 %s43, %s44
        %p251 = scmp.lt.s32.totalorder %s250, 1
        %s252 = scalar_select %p251, %s250, 1
        %s253 = smul.addr %s252, 8
        %s254 = scalar_lea.vmem %s2, %s253
        %p255 = pneg %p74
        %p256 = pneg %p71
        %s257 = sadd.s32 %s43, %s44
        %p258 = scmp.lt.s32.totalorder %s257, 1
        %s259 = scalar_select %p258, %s257, 1
        %s260 = smul.addr %s259, 8
        %s261 = scalar_lea.vmem %s3, %s260
        %p262 = pneg %p102
        %p263 = pneg %p99
        %p264 = pneg %p123
        %p265 = pneg %p120
        %p266 = pneg %p144
        %p267 = pneg %p141
        %p268 = pneg %p172
        %p269 = pneg %p169
        %s270 = sand.u32 %s159, 1
        %s271 = scalar_lea.sflag [#allocation9], %s270
        %s272 = sand.u32 %s159, 1
        %s273 = smul.addr %s272, 8
        %s274 = scalar_lea.vmem [#allocation8], %s273
        %p275 = pneg %p200
        %p276 = pneg %p197
        %s277 = sand.u32 %s187, 1
        %s278 = scalar_lea.sflag [#allocation11], %s277
        %s279 = sand.u32 %s187, 1
        %s280 = smul.addr %s279, 8
        %s281 = scalar_lea.vmem [#allocation10], %s280
        %s282 = sadd.s32 %s43, %s44
        %p283 = scmp.lt.s32.totalorder %s282, 1
        %s284 = scalar_select %p283, %s282, 1
        %s285 = smul.addr %s284, 8
        %s286 = scalar_lea.vmem %s2, %s285
        %s287 = sadd.s32 %s43, %s44
        %s288 = sadd.s32 %s43, %s44
        %p289 = scmp.lt.s32.totalorder %s288, 1
        %s290 = scalar_select %p289, %s288, 1
        %s291 = smul.addr %s290, 8
        %s292 = scalar_lea.vmem %s3, %s291
        %s293 = sadd.s32 %s43, %s44
        %s294 = sadd.s32 %s43, %s44
        %s295 = sadd.s32 %s43, %s44
        %s296 = smul.u32 %s43, 8
        %s297 = smul.u32 %s44, 8
        %s298 = sadd.s32 %s296, %s297
        %s299 = sld [smem:[#allocation6 + %s298]]
        %s300 = scalar_lea.vmem %s6, %s299
        // Predicated region
        $region37: #{tpu_custom_call.1} parent=35 // pred_check
          _
        $region38: #{tpu_custom_call.1} parent=35 // pred_check_branch
          %302 = sbr.rel target = $region40
        $region39: #{tpu_custom_call.1} parent=35 // pred_region
          // Predicated region
          $region52: #{tpu_custom_call.1} parent=39 // pred_check
            _
          $region53: #{tpu_custom_call.1} parent=39 // pred_check_branch
            %318 = sbr.rel (0) target = $region55
          $region54: #{tpu_custom_call.1} parent=39 // pred_region
            %s320 = ssub.s32 2, 1
            loop: start=0, step=1, limit=1
            $region56: #{tpu_custom_call.1} parent=54 // loop_pre_header
              _
            $region57: #{tpu_custom_call.1} parent=54 // loop_header
              %s322 = sphi 0, %s326
              %p323 = scmp.ge.s32.totalorder %s322, 1
              %s327 = sphi %s300, %s300
              %s328 = sphi [#allocation2], [#allocation2]
            $region58: #{tpu_custom_call.1} parent=54 // loop_header_branch
              %325 = sbr.rel (%p323) target = $region62
            $region59: #{tpu_custom_call.1} parent=54 // loop_body
              %v329 = vld [vmem:[%s327] sm:%s320]
              %330 = vst [vmem:[%s328] sm:%s320] %v329
            $region60: #{tpu_custom_call.1} parent=54 // loop_footer
              %s326 = sadd.s32 1, %s322
            $region61: #{tpu_custom_call.1} parent=54 // loop_footer_branch
              %321 = sbr.rel target = $region57
            $region62: #{tpu_custom_call.1} parent=54 // loop_exit
              _
          $region55: #{tpu_custom_call.1} parent=39 // pred_fallthru
            _
        $region40: #{tpu_custom_call.1} parent=35 // pred_fallthru
          _
        // Predicated region
        $region41: #{tpu_custom_call.1} parent=35 // pred_check
          _
        $region42: #{tpu_custom_call.1} parent=35 // pred_check_branch
          %304 = sbr.rel (0) target = $region44
        $region43: #{tpu_custom_call.1} parent=35 // pred_region
          %s306 = ssub.s32 2, 1
          loop: start=0, step=1, limit=1
          $region45: #{tpu_custom_call.1} parent=43 // loop_pre_header
            _
          $region46: #{tpu_custom_call.1} parent=43 // loop_header
            %s308 = sphi 0, %s312
            %p309 = scmp.ge.s32.totalorder %s308, 1
            %s313 = sphi %s300, %s300
            %s314 = sphi [#allocation2], [#allocation2]
          $region47: #{tpu_custom_call.1} parent=43 // loop_header_branch
            %311 = sbr.rel (%p309) target = $region51
          $region48: #{tpu_custom_call.1} parent=43 // loop_body
            %v315 = vld [vmem:[%s313] sm:%s306]
            %316 = vst [vmem:[%s314] sm:%s306] %v315
          $region49: #{tpu_custom_call.1} parent=43 // loop_footer
            %s312 = sadd.s32 1, %s308
          $region50: #{tpu_custom_call.1} parent=43 // loop_footer_branch
            %307 = sbr.rel target = $region46
          $region51: #{tpu_custom_call.1} parent=43 // loop_exit
            _
        $region44: #{tpu_custom_call.1} parent=35 // pred_fallthru
          _
        // Predicated region
        $region63: #{tpu_custom_call.1} parent=35 // pred_check
          _
        $region64: #{tpu_custom_call.1} parent=35 // pred_check_branch
          %333 = sbr.rel (0) target = $region66
        $region65: #{tpu_custom_call.1} parent=35 // pred_region
          %334 = vsyncadd [#allocation4], 16
        $region66: #{tpu_custom_call.1} parent=35 // pred_fallthru
          _
        %s335 = sadd.s32 %s298, 1
        %s336 = sld [smem:[#allocation6 + %s335]]
        %s337 = scalar_lea.vmem %s6, %s336
        %s338 = scalar_lea.vmem [#allocation2], 1
        %s339 = scalar_lea.sflag [#allocation4], 1
        // Predicated region
        $region67: #{tpu_custom_call.1} parent=35 // pred_check
          _
        $region68: #{tpu_custom_call.1} parent=35 // pred_check_branch
          %341 = sbr.rel target = $region70
        $region69: #{tpu_custom_call.1} parent=35 // pred_region
          // Predicated region
          $region82: #{tpu_custom_call.1} parent=69 // pred_check
            _
          $region83: #{tpu_custom_call.1} parent=69 // pred_check_branch
            %357 = sbr.rel (0) target = $region85
          $region84: #{tpu_custom_call.1} parent=69 // pred_region
            %s359 = ssub.s32 2, 1
            loop: start=0, step=1, limit=1
            $region86: #{tpu_custom_call.1} parent=84 // loop_pre_header
              _
            $region87: #{tpu_custom_call.1} parent=84 // loop_header
              %s361 = sphi 0, %s365
              %p362 = scmp.ge.s32.totalorder %s361, 1
              %s366 = sphi %s337, %s337
              %s367 = sphi %s338, %s338
            $region88: #{tpu_custom_call.1} parent=84 // loop_header_branch
              %364 = sbr.rel (%p362) target = $region92
            $region89: #{tpu_custom_call.1} parent=84 // loop_body
              %v368 = vld [vmem:[%s366] sm:%s359]
              %369 = vst [vmem:[%s367] sm:%s359] %v368
            $region90: #{tpu_custom_call.1} parent=84 // loop_footer
              %s365 = sadd.s32 1, %s361
            $region91: #{tpu_custom_call.1} parent=84 // loop_footer_branch
              %360 = sbr.rel target = $region87
            $region92: #{tpu_custom_call.1} parent=84 // loop_exit
              _
          $region85: #{tpu_custom_call.1} parent=69 // pred_fallthru
            _
        $region70: #{tpu_custom_call.1} parent=35 // pred_fallthru
          _
        // Predicated region
        $region71: #{tpu_custom_call.1} parent=35 // pred_check
          _
        $region72: #{tpu_custom_call.1} parent=35 // pred_check_branch
          %343 = sbr.rel (0) target = $region74
        $region73: #{tpu_custom_call.1} parent=35 // pred_region
          %s345 = ssub.s32 2, 1
          loop: start=0, step=1, limit=1
          $region75: #{tpu_custom_call.1} parent=73 // loop_pre_header
            _
          $region76: #{tpu_custom_call.1} parent=73 // loop_header
            %s347 = sphi 0, %s351
            %p348 = scmp.ge.s32.totalorder %s347, 1
            %s352 = sphi %s337, %s337
            %s353 = sphi %s338, %s338
          $region77: #{tpu_custom_call.1} parent=73 // loop_header_branch
            %350 = sbr.rel (%p348) target = $region81
          $region78: #{tpu_custom_call.1} parent=73 // loop_body
            %v354 = vld [vmem:[%s352] sm:%s345]
            %355 = vst [vmem:[%s353] sm:%s345] %v354
          $region79: #{tpu_custom_call.1} parent=73 // loop_footer
            %s351 = sadd.s32 1, %s347
          $region80: #{tpu_custom_call.1} parent=73 // loop_footer_branch
            %346 = sbr.rel target = $region76
          $region81: #{tpu_custom_call.1} parent=73 // loop_exit
            _
        $region74: #{tpu_custom_call.1} parent=35 // pred_fallthru
          _
        // Predicated region
        $region93: #{tpu_custom_call.1} parent=35 // pred_check
          _
        $region94: #{tpu_custom_call.1} parent=35 // pred_check_branch
          %372 = sbr.rel (0) target = $region96
        $region95: #{tpu_custom_call.1} parent=35 // pred_region
          %373 = vsyncadd %s339, 16
        $region96: #{tpu_custom_call.1} parent=35 // pred_fallthru
          _
        %s374 = sadd.s32 %s298, 2
        %s375 = sld [smem:[#allocation6 + %s374]]
        %s376 = scalar_lea.vmem %s6, %s375
        %s377 = scalar_lea.vmem [#allocation2], 2
        %s378 = scalar_lea.sflag [#allocation4], 2
        // Predicated region
        $region97: #{tpu_custom_call.1} parent=35 // pred_check
          _
        $region98: #{tpu_custom_call.1} parent=35 // pred_check_branch
          %380 = sbr.rel target = $region100
        $region99: #{tpu_custom_call.1} parent=35 // pred_region
          // Predicated region
          $region112: #{tpu_custom_call.1} parent=99 // pred_check
            _
          $region113: #{tpu_custom_call.1} parent=99 // pred_check_branch
            %396 = sbr.rel (0) target = $region115
          $region114: #{tpu_custom_call.1} parent=99 // pred_region
            %s398 = ssub.s32 2, 1
            loop: start=0, step=1, limit=1
            $region116: #{tpu_custom_call.1} parent=114 // loop_pre_header
              _
            $region117: #{tpu_custom_call.1} parent=114 // loop_header
              %s400 = sphi 0, %s404
              %p401 = scmp.ge.s32.totalorder %s400, 1
              %s405 = sphi %s376, %s376
              %s406 = sphi %s377, %s377
            $region118: #{tpu_custom_call.1} parent=114 // loop_header_branch
              %403 = sbr.rel (%p401) target = $region122
            $region119: #{tpu_custom_call.1} parent=114 // loop_body
              %v407 = vld [vmem:[%s405] sm:%s398]
              %408 = vst [vmem:[%s406] sm:%s398] %v407
            $region120: #{tpu_custom_call.1} parent=114 // loop_footer
              %s404 = sadd.s32 1, %s400
            $region121: #{tpu_custom_call.1} parent=114 // loop_footer_branch
              %399 = sbr.rel target = $region117
            $region122: #{tpu_custom_call.1} parent=114 // loop_exit
              _
          $region115: #{tpu_custom_call.1} parent=99 // pred_fallthru
            _
        $region100: #{tpu_custom_call.1} parent=35 // pred_fallthru
          _
        // Predicated region
        $region101: #{tpu_custom_call.1} parent=35 // pred_check
          _
        $region102: #{tpu_custom_call.1} parent=35 // pred_check_branch
          %382 = sbr.rel (0) target = $region104
        $region103: #{tpu_custom_call.1} parent=35 // pred_region
          %s384 = ssub.s32 2, 1
          loop: start=0, step=1, limit=1
          $region105: #{tpu_custom_call.1} parent=103 // loop_pre_header
            _
          $region106: #{tpu_custom_call.1} parent=103 // loop_header
            %s386 = sphi 0, %s390
            %p387 = scmp.ge.s32.totalorder %s386, 1
            %s391 = sphi %s376, %s376
            %s392 = sphi %s377, %s377
          $region107: #{tpu_custom_call.1} parent=103 // loop_header_branch
            %389 = sbr.rel (%p387) target = $region111
          $region108: #{tpu_custom_call.1} parent=103 // loop_body
            %v393 = vld [vmem:[%s391] sm:%s384]
            %394 = vst [vmem:[%s392] sm:%s384] %v393
          $region109: #{tpu_custom_call.1} parent=103 // loop_footer
            %s390 = sadd.s32 1, %s386
          $region110: #{tpu_custom_call.1} parent=103 // loop_footer_branch
            %385 = sbr.rel target = $region106
          $region111: #{tpu_custom_call.1} parent=103 // loop_exit
            _
        $region104: #{tpu_custom_call.1} parent=35 // pred_fallthru
          _
        // Predicated region
        $region123: #{tpu_custom_call.1} parent=35 // pred_check
          _
        $region124: #{tpu_custom_call.1} parent=35 // pred_check_branch
          %411 = sbr.rel (0) target = $region126
        $region125: #{tpu_custom_call.1} parent=35 // pred_region
          %412 = vsyncadd %s378, 16
        $region126: #{tpu_custom_call.1} parent=35 // pred_fallthru
          _
        %s413 = sadd.s32 %s298, 3
        %s414 = sld [smem:[#allocation6 + %s413]]
        %s415 = scalar_lea.vmem %s6, %s414
        %s416 = scalar_lea.vmem [#allocation2], 3
        %s417 = scalar_lea.sflag [#allocation4], 3
        // Predicated region
        $region127: #{tpu_custom_call.1} parent=35 // pred_check
          _
        $region128: #{tpu_custom_call.1} parent=35 // pred_check_branch
          %419 = sbr.rel target = $region130
        $region129: #{tpu_custom_call.1} parent=35 // pred_region
          // Predicated region
          $region142: #{tpu_custom_call.1} parent=129 // pred_check
            _
          $region143: #{tpu_custom_call.1} parent=129 // pred_check_branch
            %435 = sbr.rel (0) target = $region145
          $region144: #{tpu_custom_call.1} parent=129 // pred_region
            %s437 = ssub.s32 2, 1
            loop: start=0, step=1, limit=1
            $region146: #{tpu_custom_call.1} parent=144 // loop_pre_header
              _
            $region147: #{tpu_custom_call.1} parent=144 // loop_header
              %s439 = sphi 0, %s443
              %p440 = scmp.ge.s32.totalorder %s439, 1
              %s444 = sphi %s415, %s415
              %s445 = sphi %s416, %s416
            $region148: #{tpu_custom_call.1} parent=144 // loop_header_branch
              %442 = sbr.rel (%p440) target = $region152
            $region149: #{tpu_custom_call.1} parent=144 // loop_body
              %v446 = vld [vmem:[%s444] sm:%s437]
              %447 = vst [vmem:[%s445] sm:%s437] %v446
            $region150: #{tpu_custom_call.1} parent=144 // loop_footer
              %s443 = sadd.s32 1, %s439
            $region151: #{tpu_custom_call.1} parent=144 // loop_footer_branch
              %438 = sbr.rel target = $region147
            $region152: #{tpu_custom_call.1} parent=144 // loop_exit
              _
          $region145: #{tpu_custom_call.1} parent=129 // pred_fallthru
            _
        $region130: #{tpu_custom_call.1} parent=35 // pred_fallthru
          _
        // Predicated region
        $region131: #{tpu_custom_call.1} parent=35 // pred_check
          _
        $region132: #{tpu_custom_call.1} parent=35 // pred_check_branch
          %421 = sbr.rel (0) target = $region134
        $region133: #{tpu_custom_call.1} parent=35 // pred_region
          %s423 = ssub.s32 2, 1
          loop: start=0, step=1, limit=1
          $region135: #{tpu_custom_call.1} parent=133 // loop_pre_header
            _
          $region136: #{tpu_custom_call.1} parent=133 // loop_header
            %s425 = sphi 0, %s429
            %p426 = scmp.ge.s32.totalorder %s425, 1
            %s430 = sphi %s415, %s415
            %s431 = sphi %s416, %s416
          $region137: #{tpu_custom_call.1} parent=133 // loop_header_branch
            %428 = sbr.rel (%p426) target = $region141
          $region138: #{tpu_custom_call.1} parent=133 // loop_body
            %v432 = vld [vmem:[%s430] sm:%s423]
            %433 = vst [vmem:[%s431] sm:%s423] %v432
          $region139: #{tpu_custom_call.1} parent=133 // loop_footer
            %s429 = sadd.s32 1, %s425
          $region140: #{tpu_custom_call.1} parent=133 // loop_footer_branch
            %424 = sbr.rel target = $region136
          $region141: #{tpu_custom_call.1} parent=133 // loop_exit
            _
        $region134: #{tpu_custom_call.1} parent=35 // pred_fallthru
          _
        // Predicated region
        $region153: #{tpu_custom_call.1} parent=35 // pred_check
          _
        $region154: #{tpu_custom_call.1} parent=35 // pred_check_branch
          %450 = sbr.rel (0) target = $region156
        $region155: #{tpu_custom_call.1} parent=35 // pred_region
          %451 = vsyncadd %s417, 16
        $region156: #{tpu_custom_call.1} parent=35 // pred_fallthru
          _
        %s452 = sadd.s32 %s298, 4
        %s453 = sld [smem:[#allocation6 + %s452]]
        %s454 = scalar_lea.vmem %s6, %s453
        %s455 = scalar_lea.vmem [#allocation2], 4
        %s456 = scalar_lea.sflag [#allocation4], 4
        // Predicated region
        $region157: #{tpu_custom_call.1} parent=35 // pred_check
          _
        $region158: #{tpu_custom_call.1} parent=35 // pred_check_branch
          %458 = sbr.rel target = $region160
        $region159: #{tpu_custom_call.1} parent=35 // pred_region
          // Predicated region
          $region172: #{tpu_custom_call.1} parent=159 // pred_check
            _
          $region173: #{tpu_custom_call.1} parent=159 // pred_check_branch
            %474 = sbr.rel (0) target = $region175
          $region174: #{tpu_custom_call.1} parent=159 // pred_region
            %s476 = ssub.s32 2, 1
            loop: start=0, step=1, limit=1
            $region176: #{tpu_custom_call.1} parent=174 // loop_pre_header
              _
            $region177: #{tpu_custom_call.1} parent=174 // loop_header
              %s478 = sphi 0, %s482
              %p479 = scmp.ge.s32.totalorder %s478, 1
              %s483 = sphi %s454, %s454
              %s484 = sphi %s455, %s455
            $region178: #{tpu_custom_call.1} parent=174 // loop_header_branch
              %481 = sbr.rel (%p479) target = $region182
            $region179: #{tpu_custom_call.1} parent=174 // loop_body
              %v485 = vld [vmem:[%s483] sm:%s476]
              %486 = vst [vmem:[%s484] sm:%s476] %v485
            $region180: #{tpu_custom_call.1} parent=174 // loop_footer
              %s482 = sadd.s32 1, %s478
            $region181: #{tpu_custom_call.1} parent=174 // loop_footer_branch
              %477 = sbr.rel target = $region177
            $region182: #{tpu_custom_call.1} parent=174 // loop_exit
              _
          $region175: #{tpu_custom_call.1} parent=159 // pred_fallthru
            _
        $region160: #{tpu_custom_call.1} parent=35 // pred_fallthru
          _
        // Predicated region
        $region161: #{tpu_custom_call.1} parent=35 // pred_check
          _
        $region162: #{tpu_custom_call.1} parent=35 // pred_check_branch
          %460 = sbr.rel (0) target = $region164
        $region163: #{tpu_custom_call.1} parent=35 // pred_region
          %s462 = ssub.s32 2, 1
          loop: start=0, step=1, limit=1
          $region165: #{tpu_custom_call.1} parent=163 // loop_pre_header
            _
          $region166: #{tpu_custom_call.1} parent=163 // loop_header
            %s464 = sphi 0, %s468
            %p465 = scmp.ge.s32.totalorder %s464, 1
            %s469 = sphi %s454, %s454
            %s470 = sphi %s455, %s455
          $region167: #{tpu_custom_call.1} parent=163 // loop_header_branch
            %467 = sbr.rel (%p465) target = $region171
          $region168: #{tpu_custom_call.1} parent=163 // loop_body
            %v471 = vld [vmem:[%s469] sm:%s462]
            %472 = vst [vmem:[%s470] sm:%s462] %v471
          $region169: #{tpu_custom_call.1} parent=163 // loop_footer
            %s468 = sadd.s32 1, %s464
          $region170: #{tpu_custom_call.1} parent=163 // loop_footer_branch
            %463 = sbr.rel target = $region166
          $region171: #{tpu_custom_call.1} parent=163 // loop_exit
            _
        $region164: #{tpu_custom_call.1} parent=35 // pred_fallthru
          _
        // Predicated region
        $region183: #{tpu_custom_call.1} parent=35 // pred_check
          _
        $region184: #{tpu_custom_call.1} parent=35 // pred_check_branch
          %489 = sbr.rel (0) target = $region186
        $region185: #{tpu_custom_call.1} parent=35 // pred_region
          %490 = vsyncadd %s456, 16
        $region186: #{tpu_custom_call.1} parent=35 // pred_fallthru
          _
        %s491 = sadd.s32 %s298, 5
        %s492 = sld [smem:[#allocation6 + %s491]]
        %s493 = scalar_lea.vmem %s6, %s492
        %s494 = scalar_lea.vmem [#allocation2], 5
        %s495 = scalar_lea.sflag [#allocation4], 5
        // Predicated region
        $region187: #{tpu_custom_call.1} parent=35 // pred_check
          _
        $region188: #{tpu_custom_call.1} parent=35 // pred_check_branch
          %497 = sbr.rel target = $region190
        $region189: #{tpu_custom_call.1} parent=35 // pred_region
          // Predicated region
          $region202: #{tpu_custom_call.1} parent=189 // pred_check
            _
          $region203: #{tpu_custom_call.1} parent=189 // pred_check_branch
            %513 = sbr.rel (0) target = $region205
          $region204: #{tpu_custom_call.1} parent=189 // pred_region
            %s515 = ssub.s32 2, 1
            loop: start=0, step=1, limit=1
            $region206: #{tpu_custom_call.1} parent=204 // loop_pre_header
              _
            $region207: #{tpu_custom_call.1} parent=204 // loop_header
              %s517 = sphi 0, %s521
              %p518 = scmp.ge.s32.totalorder %s517, 1
              %s522 = sphi %s493, %s493
              %s523 = sphi %s494, %s494
            $region208: #{tpu_custom_call.1} parent=204 // loop_header_branch
              %520 = sbr.rel (%p518) target = $region212
            $region209: #{tpu_custom_call.1} parent=204 // loop_body
              %v524 = vld [vmem:[%s522] sm:%s515]
              %525 = vst [vmem:[%s523] sm:%s515] %v524
            $region210: #{tpu_custom_call.1} parent=204 // loop_footer
              %s521 = sadd.s32 1, %s517
            $region211: #{tpu_custom_call.1} parent=204 // loop_footer_branch
              %516 = sbr.rel target = $region207
            $region212: #{tpu_custom_call.1} parent=204 // loop_exit
              _
          $region205: #{tpu_custom_call.1} parent=189 // pred_fallthru
            _
        $region190: #{tpu_custom_call.1} parent=35 // pred_fallthru
          _
        // Predicated region
        $region191: #{tpu_custom_call.1} parent=35 // pred_check
          _
        $region192: #{tpu_custom_call.1} parent=35 // pred_check_branch
          %499 = sbr.rel (0) target = $region194
        $region193: #{tpu_custom_call.1} parent=35 // pred_region
          %s501 = ssub.s32 2, 1
          loop: start=0, step=1, limit=1
          $region195: #{tpu_custom_call.1} parent=193 // loop_pre_header
            _
          $region196: #{tpu_custom_call.1} parent=193 // loop_header
            %s503 = sphi 0, %s507
            %p504 = scmp.ge.s32.totalorder %s503, 1
            %s508 = sphi %s493, %s493
            %s509 = sphi %s494, %s494
          $region197: #{tpu_custom_call.1} parent=193 // loop_header_branch
            %506 = sbr.rel (%p504) target = $region201
          $region198: #{tpu_custom_call.1} parent=193 // loop_body
            %v510 = vld [vmem:[%s508] sm:%s501]
            %511 = vst [vmem:[%s509] sm:%s501] %v510
          $region199: #{tpu_custom_call.1} parent=193 // loop_footer
            %s507 = sadd.s32 1, %s503
          $region200: #{tpu_custom_call.1} parent=193 // loop_footer_branch
            %502 = sbr.rel target = $region196
          $region201: #{tpu_custom_call.1} parent=193 // loop_exit
            _
        $region194: #{tpu_custom_call.1} parent=35 // pred_fallthru
          _
        // Predicated region
        $region213: #{tpu_custom_call.1} parent=35 // pred_check
          _
        $region214: #{tpu_custom_call.1} parent=35 // pred_check_branch
          %528 = sbr.rel (0) target = $region216
        $region215: #{tpu_custom_call.1} parent=35 // pred_region
          %529 = vsyncadd %s495, 16
        $region216: #{tpu_custom_call.1} parent=35 // pred_fallthru
          _
        %s530 = sadd.s32 %s298, 6
        %s531 = sld [smem:[#allocation6 + %s530]]
        %s532 = scalar_lea.vmem %s6, %s531
        %s533 = scalar_lea.vmem [#allocation2], 6
        %s534 = scalar_lea.sflag [#allocation4], 6
        // Predicated region
        $region217: #{tpu_custom_call.1} parent=35 // pred_check
          _
        $region218: #{tpu_custom_call.1} parent=35 // pred_check_branch
          %536 = sbr.rel target = $region220
        $region219: #{tpu_custom_call.1} parent=35 // pred_region
          // Predicated region
          $region232: #{tpu_custom_call.1} parent=219 // pred_check
            _
          $region233: #{tpu_custom_call.1} parent=219 // pred_check_branch
            %552 = sbr.rel (0) target = $region235
          $region234: #{tpu_custom_call.1} parent=219 // pred_region
            %s554 = ssub.s32 2, 1
            loop: start=0, step=1, limit=1
            $region236: #{tpu_custom_call.1} parent=234 // loop_pre_header
              _
            $region237: #{tpu_custom_call.1} parent=234 // loop_header
              %s556 = sphi 0, %s560
              %p557 = scmp.ge.s32.totalorder %s556, 1
              %s561 = sphi %s532, %s532
              %s562 = sphi %s533, %s533
            $region238: #{tpu_custom_call.1} parent=234 // loop_header_branch
              %559 = sbr.rel (%p557) target = $region242
            $region239: #{tpu_custom_call.1} parent=234 // loop_body
              %v563 = vld [vmem:[%s561] sm:%s554]
              %564 = vst [vmem:[%s562] sm:%s554] %v563
            $region240: #{tpu_custom_call.1} parent=234 // loop_footer
              %s560 = sadd.s32 1, %s556
            $region241: #{tpu_custom_call.1} parent=234 // loop_footer_branch
              %555 = sbr.rel target = $region237
            $region242: #{tpu_custom_call.1} parent=234 // loop_exit
              _
          $region235: #{tpu_custom_call.1} parent=219 // pred_fallthru
            _
        $region220: #{tpu_custom_call.1} parent=35 // pred_fallthru
          _
        // Predicated region
        $region221: #{tpu_custom_call.1} parent=35 // pred_check
          _
        $region222: #{tpu_custom_call.1} parent=35 // pred_check_branch
          %538 = sbr.rel (0) target = $region224
        $region223: #{tpu_custom_call.1} parent=35 // pred_region
          %s540 = ssub.s32 2, 1
          loop: start=0, step=1, limit=1
          $region225: #{tpu_custom_call.1} parent=223 // loop_pre_header
            _
          $region226: #{tpu_custom_call.1} parent=223 // loop_header
            %s542 = sphi 0, %s546
            %p543 = scmp.ge.s32.totalorder %s542, 1
            %s547 = sphi %s532, %s532
            %s548 = sphi %s533, %s533
          $region227: #{tpu_custom_call.1} parent=223 // loop_header_branch
            %545 = sbr.rel (%p543) target = $region231
          $region228: #{tpu_custom_call.1} parent=223 // loop_body
            %v549 = vld [vmem:[%s547] sm:%s540]
            %550 = vst [vmem:[%s548] sm:%s540] %v549
          $region229: #{tpu_custom_call.1} parent=223 // loop_footer
            %s546 = sadd.s32 1, %s542
          $region230: #{tpu_custom_call.1} parent=223 // loop_footer_branch
            %541 = sbr.rel target = $region226
          $region231: #{tpu_custom_call.1} parent=223 // loop_exit
            _
        $region224: #{tpu_custom_call.1} parent=35 // pred_fallthru
          _
        // Predicated region
        $region243: #{tpu_custom_call.1} parent=35 // pred_check
          _
        $region244: #{tpu_custom_call.1} parent=35 // pred_check_branch
          %567 = sbr.rel (0) target = $region246
        $region245: #{tpu_custom_call.1} parent=35 // pred_region
          %568 = vsyncadd %s534, 16
        $region246: #{tpu_custom_call.1} parent=35 // pred_fallthru
          _
        %s569 = sadd.s32 %s298, 7
        %s570 = sld [smem:[#allocation6 + %s569]]
        %s571 = scalar_lea.vmem %s6, %s570
        %s572 = scalar_lea.vmem [#allocation2], 7
        %s573 = scalar_lea.sflag [#allocation4], 7
        // Predicated region
        $region247: #{tpu_custom_call.1} parent=35 // pred_check
          _
        $region248: #{tpu_custom_call.1} parent=35 // pred_check_branch
          %575 = sbr.rel target = $region250
        $region249: #{tpu_custom_call.1} parent=35 // pred_region
          // Predicated region
          $region262: #{tpu_custom_call.1} parent=249 // pred_check
            _
          $region263: #{tpu_custom_call.1} parent=249 // pred_check_branch
            %591 = sbr.rel (0) target = $region265
          $region264: #{tpu_custom_call.1} parent=249 // pred_region
            %s593 = ssub.s32 2, 1
            loop: start=0, step=1, limit=1
            $region266: #{tpu_custom_call.1} parent=264 // loop_pre_header
              _
            $region267: #{tpu_custom_call.1} parent=264 // loop_header
              %s595 = sphi 0, %s599
              %p596 = scmp.ge.s32.totalorder %s595, 1
              %s600 = sphi %s571, %s571
              %s601 = sphi %s572, %s572
            $region268: #{tpu_custom_call.1} parent=264 // loop_header_branch
              %598 = sbr.rel (%p596) target = $region272
            $region269: #{tpu_custom_call.1} parent=264 // loop_body
              %v602 = vld [vmem:[%s600] sm:%s593]
              %603 = vst [vmem:[%s601] sm:%s593] %v602
            $region270: #{tpu_custom_call.1} parent=264 // loop_footer
              %s599 = sadd.s32 1, %s595
            $region271: #{tpu_custom_call.1} parent=264 // loop_footer_branch
              %594 = sbr.rel target = $region267
            $region272: #{tpu_custom_call.1} parent=264 // loop_exit
              _
          $region265: #{tpu_custom_call.1} parent=249 // pred_fallthru
            _
        $region250: #{tpu_custom_call.1} parent=35 // pred_fallthru
          _
        // Predicated region
        $region251: #{tpu_custom_call.1} parent=35 // pred_check
          _
        $region252: #{tpu_custom_call.1} parent=35 // pred_check_branch
          %577 = sbr.rel (0) target = $region254
        $region253: #{tpu_custom_call.1} parent=35 // pred_region
          %s579 = ssub.s32 2, 1
          loop: start=0, step=1, limit=1
          $region255: #{tpu_custom_call.1} parent=253 // loop_pre_header
            _
          $region256: #{tpu_custom_call.1} parent=253 // loop_header
            %s581 = sphi 0, %s585
            %p582 = scmp.ge.s32.totalorder %s581, 1
            %s586 = sphi %s571, %s571
            %s587 = sphi %s572, %s572
          $region257: #{tpu_custom_call.1} parent=253 // loop_header_branch
            %584 = sbr.rel (%p582) target = $region261
          $region258: #{tpu_custom_call.1} parent=253 // loop_body
            %v588 = vld [vmem:[%s586] sm:%s579]
            %589 = vst [vmem:[%s587] sm:%s579] %v588
          $region259: #{tpu_custom_call.1} parent=253 // loop_footer
            %s585 = sadd.s32 1, %s581
          $region260: #{tpu_custom_call.1} parent=253 // loop_footer_branch
            %580 = sbr.rel target = $region256
          $region261: #{tpu_custom_call.1} parent=253 // loop_exit
            _
        $region254: #{tpu_custom_call.1} parent=35 // pred_fallthru
          _
        // Predicated region
        $region273: #{tpu_custom_call.1} parent=35 // pred_check
          _
        $region274: #{tpu_custom_call.1} parent=35 // pred_check_branch
          %606 = sbr.rel (0) target = $region276
        $region275: #{tpu_custom_call.1} parent=35 // pred_region
          %607 = vsyncadd %s573, 16
        $region276: #{tpu_custom_call.1} parent=35 // pred_fallthru
          _
        %s608 = smul.u32 %s43, 2
        %s609 = sld [smem:[#allocation7 + %s608]]
        %s610 = sadd.s32 %s608, 1
        %s611 = sld [smem:[#allocation7 + %s610]]
        %s612 = scalar_lea.vmem %s6, %s609
        %s613 = scalar_lea.sflag [#allocation4], 8
        // Predicated region
        $region277: #{tpu_custom_call.1} parent=35 // pred_check
          _
        $region278: #{tpu_custom_call.1} parent=35 // pred_check_branch
          %615 = sbr.rel target = $region280
        $region279: #{tpu_custom_call.1} parent=35 // pred_region
          // Predicated region
          $region292: #{tpu_custom_call.1} parent=279 // pred_check
            _
          $region293: #{tpu_custom_call.1} parent=279 // pred_check_branch
            %631 = sbr.rel (0) target = $region295
          $region294: #{tpu_custom_call.1} parent=279 // pred_region
            %s633 = ssub.s32 2, 1
            loop: start=0, step=1, limit=1
            $region296: #{tpu_custom_call.1} parent=294 // loop_pre_header
              _
            $region297: #{tpu_custom_call.1} parent=294 // loop_header
              %s635 = sphi 0, %s639
              %p636 = scmp.ge.s32.totalorder %s635, 1
              %s640 = sphi %s612, %s612
              %s641 = sphi [#allocation3], [#allocation3]
            $region298: #{tpu_custom_call.1} parent=294 // loop_header_branch
              %638 = sbr.rel (%p636) target = $region302
            $region299: #{tpu_custom_call.1} parent=294 // loop_body
              %v642 = vld [vmem:[%s640] sm:%s633]
              %643 = vst [vmem:[%s641] sm:%s633] %v642
            $region300: #{tpu_custom_call.1} parent=294 // loop_footer
              %s639 = sadd.s32 1, %s635
            $region301: #{tpu_custom_call.1} parent=294 // loop_footer_branch
              %634 = sbr.rel target = $region297
            $region302: #{tpu_custom_call.1} parent=294 // loop_exit
              _
          $region295: #{tpu_custom_call.1} parent=279 // pred_fallthru
            _
        $region280: #{tpu_custom_call.1} parent=35 // pred_fallthru
          _
        // Predicated region
        $region281: #{tpu_custom_call.1} parent=35 // pred_check
          _
        $region282: #{tpu_custom_call.1} parent=35 // pred_check_branch
          %617 = sbr.rel (0) target = $region284
        $region283: #{tpu_custom_call.1} parent=35 // pred_region
          %s619 = ssub.s32 2, 1
          loop: start=0, step=1, limit=1
          $region285: #{tpu_custom_call.1} parent=283 // loop_pre_header
            _
          $region286: #{tpu_custom_call.1} parent=283 // loop_header
            %s621 = sphi 0, %s625
            %p622 = scmp.ge.s32.totalorder %s621, 1
            %s626 = sphi %s612, %s612
            %s627 = sphi [#allocation3], [#allocation3]
          $region287: #{tpu_custom_call.1} parent=283 // loop_header_branch
            %624 = sbr.rel (%p622) target = $region291
          $region288: #{tpu_custom_call.1} parent=283 // loop_body
            %v628 = vld [vmem:[%s626] sm:%s619]
            %629 = vst [vmem:[%s627] sm:%s619] %v628
          $region289: #{tpu_custom_call.1} parent=283 // loop_footer
            %s625 = sadd.s32 1, %s621
          $region290: #{tpu_custom_call.1} parent=283 // loop_footer_branch
            %620 = sbr.rel target = $region286
          $region291: #{tpu_custom_call.1} parent=283 // loop_exit
            _
        $region284: #{tpu_custom_call.1} parent=35 // pred_fallthru
          _
        // Predicated region
        $region303: #{tpu_custom_call.1} parent=35 // pred_check
          _
        $region304: #{tpu_custom_call.1} parent=35 // pred_check_branch
          %646 = sbr.rel (0) target = $region306
        $region305: #{tpu_custom_call.1} parent=35 // pred_region
          %647 = vsyncadd %s613, 16
        $region306: #{tpu_custom_call.1} parent=35 // pred_fallthru
          _
        %s648 = scalar_lea.vmem %s6, %s611
        %s649 = scalar_lea.vmem [#allocation3], 1
        %s650 = scalar_lea.sflag [#allocation4], 9
        // Predicated region
        $region307: #{tpu_custom_call.1} parent=35 // pred_check
          _
        $region308: #{tpu_custom_call.1} parent=35 // pred_check_branch
          %652 = sbr.rel target = $region310
        $region309: #{tpu_custom_call.1} parent=35 // pred_region
          // Predicated region
          $region322: #{tpu_custom_call.1} parent=309 // pred_check
            _
          $region323: #{tpu_custom_call.1} parent=309 // pred_check_branch
            %668 = sbr.rel (0) target = $region325
          $region324: #{tpu_custom_call.1} parent=309 // pred_region
            %s670 = ssub.s32 2, 1
            loop: start=0, step=1, limit=1
            $region326: #{tpu_custom_call.1} parent=324 // loop_pre_header
              _
            $region327: #{tpu_custom_call.1} parent=324 // loop_header
              %s672 = sphi 0, %s676
              %p673 = scmp.ge.s32.totalorder %s672, 1
              %s677 = sphi %s648, %s648
              %s678 = sphi %s649, %s649
            $region328: #{tpu_custom_call.1} parent=324 // loop_header_branch
              %675 = sbr.rel (%p673) target = $region332
            $region329: #{tpu_custom_call.1} parent=324 // loop_body
              %v679 = vld [vmem:[%s677] sm:%s670]
              %680 = vst [vmem:[%s678] sm:%s670] %v679
            $region330: #{tpu_custom_call.1} parent=324 // loop_footer
              %s676 = sadd.s32 1, %s672
            $region331: #{tpu_custom_call.1} parent=324 // loop_footer_branch
              %671 = sbr.rel target = $region327
            $region332: #{tpu_custom_call.1} parent=324 // loop_exit
              _
          $region325: #{tpu_custom_call.1} parent=309 // pred_fallthru
            _
        $region310: #{tpu_custom_call.1} parent=35 // pred_fallthru
          _
        // Predicated region
        $region311: #{tpu_custom_call.1} parent=35 // pred_check
          _
        $region312: #{tpu_custom_call.1} parent=35 // pred_check_branch
          %654 = sbr.rel (0) target = $region314
        $region313: #{tpu_custom_call.1} parent=35 // pred_region
          %s656 = ssub.s32 2, 1
          loop: start=0, step=1, limit=1
          $region315: #{tpu_custom_call.1} parent=313 // loop_pre_header
            _
          $region316: #{tpu_custom_call.1} parent=313 // loop_header
            %s658 = sphi 0, %s662
            %p659 = scmp.ge.s32.totalorder %s658, 1
            %s663 = sphi %s648, %s648
            %s664 = sphi %s649, %s649
          $region317: #{tpu_custom_call.1} parent=313 // loop_header_branch
            %661 = sbr.rel (%p659) target = $region321
          $region318: #{tpu_custom_call.1} parent=313 // loop_body
            %v665 = vld [vmem:[%s663] sm:%s656]
            %666 = vst [vmem:[%s664] sm:%s656] %v665
          $region319: #{tpu_custom_call.1} parent=313 // loop_footer
            %s662 = sadd.s32 1, %s658
          $region320: #{tpu_custom_call.1} parent=313 // loop_footer_branch
            %657 = sbr.rel target = $region316
          $region321: #{tpu_custom_call.1} parent=313 // loop_exit
            _
        $region314: #{tpu_custom_call.1} parent=35 // pred_fallthru
          _
        // Predicated region
        $region333: #{tpu_custom_call.1} parent=35 // pred_check
          _
        $region334: #{tpu_custom_call.1} parent=35 // pred_check_branch
          %683 = sbr.rel (0) target = $region336
        $region335: #{tpu_custom_call.1} parent=35 // pred_region
          %684 = vsyncadd %s650, 16
        $region336: #{tpu_custom_call.1} parent=35 // pred_fallthru
          _
        %v685 = vld [vmem:[%s286] sm:$0xff]
        %v686 = vld [vmem:[%s4] sm:$0xff]
        %v687 = vld [vmem:[%s4 + $0x8] sm:$0xff]
        %v688 = vld [vmem:[%s4 + $0x10] sm:$0x1]
        %v689 = vlaneseq
        %v690 = vand.u32 %v689, 127
        %691 = vset.pattern.permute.xlu0 0
        %692 = vperm.xlu0 %691, %v685
        %v693 = vpop.permute.xlu0 %692
        %vm694 = vcmp.eq.s32.totalorder %v693, %v690
        %v695 = vsel %vm694, 1, 0
        %v696 = vcvt.s32.f32 %v695
        %vm697 = vcmask 138240
        %v699 = vsel %vm697, %v696, 0
        %vm701 = vcmask 1040384
        %v703 = vsel %vm701, %v688, 0
        %705 = vmatpush.msra.mxu0 0.0
        %706 = vmatpush.msra.mxu0 0.0
        %707 = vmatpush.msra.mxu0 0.0
        %708 = vmatpush.msra.mxu0 0.0
        %709 = vmatpush.msra.mxu0 0.0
        %710 = vmatpush.msra.mxu0 0.0
        %711 = vmatpush.msra.mxu0 0.0
        %712 = vmatpush.msra.mxu0 0.0
        %713 = vmatpush.msra.mxu0 0.0
        %714 = vmatpush.msra.mxu0 0.0
        %715 = vmatpush.msra.mxu0 0.0
        %716 = vmatpush.msra.mxu0 0.0
        %717 = vmatpush.msra.mxu0 0.0
        %718 = vmatpush.msra.mxu0 %v703
        %719 = vmatpush.msra.mxu0 %v687
        %720 = vmatpush.msra.mxu0 %v686
        %721 = vmatmul.f32.gmra.mxu0 %v699
        %v722 = vpop.f32.mrf.mxu0
        %v723 = vadd.f32 0.0, %v722
        %724 = vdwg.mxu0
        %v725 = vld [vmem:[%s292] sm:$0xff]
        %v726 = vld [vmem:[%s5] sm:$0xff]
        %v727 = vld [vmem:[%s5 + $0x8] sm:$0xff]
        %v728 = vld [vmem:[%s5 + $0x10] sm:$0x1]
        %729 = vset.pattern.permute.xlu0 0
        %730 = vperm.xlu0 %729, %v725
        %v731 = vpop.permute.xlu0 %730
        %vm732 = vcmp.eq.s32.totalorder %v731, %v690
        %v733 = vsel %vm732, 1, 0
        %v734 = vcvt.s32.f32 %v733
        %v736 = vsel %vm697, %v734, 0
        %v739 = vsel %vm701, %v728, 0
        %741 = vmatpush.msra.mxu0 0.0
        %742 = vmatpush.msra.mxu0 0.0
        %743 = vmatpush.msra.mxu0 0.0
        %744 = vmatpush.msra.mxu0 0.0
        %745 = vmatpush.msra.mxu0 0.0
        %746 = vmatpush.msra.mxu0 0.0
        %747 = vmatpush.msra.mxu0 0.0
        %748 = vmatpush.msra.mxu0 0.0
        %749 = vmatpush.msra.mxu0 0.0
        %750 = vmatpush.msra.mxu0 0.0
        %751 = vmatpush.msra.mxu0 0.0
        %752 = vmatpush.msra.mxu0 0.0
        %753 = vmatpush.msra.mxu0 0.0
        %754 = vmatpush.msra.mxu0 %v739
        %755 = vmatpush.msra.mxu0 %v727
        %756 = vmatpush.msra.mxu0 %v726
        %757 = vmatmul.f32.gmra.mxu0 %v736
        %v758 = vpop.f32.mrf.mxu0
        %v759 = vadd.f32 0.0, %v758
        %760 = vdwg.mxu0
        %s761 = smul.u32 1, 1
        %s762 = sshll.u32 %s761, 4
        %763 = dma.done [#allocation4], %s762
        %s764 = sshll.u32 %s761, 4
        %765 = dma.done %s339, %s764
        %s766 = sshll.u32 %s761, 4
        %767 = dma.done %s378, %s766
        %s768 = sshll.u32 %s761, 4
        %769 = dma.done %s417, %s768
        %s770 = sshll.u32 %s761, 4
        %771 = dma.done %s456, %s770
        %s772 = sshll.u32 %s761, 4
        %773 = dma.done %s495, %s772
        %s774 = sshll.u32 %s761, 4
        %775 = dma.done %s534, %s774
        %s776 = sshll.u32 %s761, 4
        %777 = dma.done %s573, %s776
        %s778 = sshll.u32 %s761, 4
        %779 = dma.done %s613, %s778
        %s780 = sshll.u32 %s761, 4
        %781 = dma.done %s650, %s780
        %v782 = vld [vmem:[#allocation2] sm:$0xff]
        %vm783 = vcmask 130048
        %784 = vst.msk [vmem:[%s274] sm:$0xff] %vm783, %v782
        %786 = vrot.lane.b32.xlu0 %v723, 16
        %v787 = vpop.permute.xlu0 %786
        %vm789 = vcmask 171136
        %790 = vst.msk [vmem:[%s274] sm:$0xff] %vm789, %v787
        %792 = vrot.lane.b32.xlu0 %v759, 21
        %v793 = vpop.permute.xlu0 %792
        %vm795 = vcmask 212136
        %796 = vst.msk [vmem:[%s274] sm:$0xff] %vm795, %v793
        %797 = vst.msk [vmem:[%s281] sm:$0xff] %vm783, %v782
        %v798 = vld [vmem:[#allocation3] sm:$0x1]
        %v799 = vperm.slane %v798, 0
        %801 = vrot.lane.b32.xlu0 %v799, 16
        %v802 = vpop.permute.xlu0 %801
        %vm804 = vcmask 261248
        %805 = vst.msk [vmem:[%s281] sm:$0xff] %vm804, %v802
        %v806 = vld [vmem:[#allocation3 + $0x1] sm:$0x1]
        %v807 = vperm.slane %v806, 0
        %809 = vrot.lane.b32.xlu0 %v807, 32
        %v810 = vpop.permute.xlu0 %809
        %vm812 = vcmask 392448
        %813 = vst.msk [vmem:[%s281] sm:$0xff] %vm812, %v810
        %s814 = sand.u32 %s159, 1
        %s815 = scalar_lea.sflag [#allocation9], %s814
        %s816 = sand.u32 %s159, 1
        %s817 = smul.addr %s816, 8
        %s818 = scalar_lea.vmem [#allocation8], %s817
        %s819 = sand.u32 %s187, 1
        %s820 = scalar_lea.sflag [#allocation11], %s819
        %s821 = sand.u32 %s187, 1
        %s822 = smul.addr %s821, 8
        %s823 = scalar_lea.vmem [#allocation10], %s822
        // Predicated region
        $region337: #{tpu_custom_call.1} parent=35 // pred_check
          %p824 = pneg %p169
        $region338: #{tpu_custom_call.1} parent=35 // pred_check_branch
          %826 = sbr.rel (%p824) target = $region340
        $region339: #{tpu_custom_call.1} parent=35 // pred_region
          %s827 = sadd.s32 %s43, %s44
          %829 = vsyncadd %s815, 0
          %s830 = smul.addr %s827, 8
          %s831 = scalar_lea.hbm %s7, %s830
          %s833 = sshll.u32 %s818, 4
          %s834 = int_to_ptr.vmem [resolvable:$true] %s833
          %s835 = sshll.u32 %s831, 4
          %s836 = int_to_ptr.hbm [resolvable:$true] %s835
          %838 = dma.vmem_to_hbm [thread:$0]  %s834, 128, %s836, %s815
        $region340: #{tpu_custom_call.1} parent=35 // pred_fallthru
          _
        // Predicated region
        $region341: #{tpu_custom_call.1} parent=35 // pred_check
          %p839 = pneg %p197
        $region342: #{tpu_custom_call.1} parent=35 // pred_check_branch
          %841 = sbr.rel (%p839) target = $region344
        $region343: #{tpu_custom_call.1} parent=35 // pred_region
          %s842 = sadd.s32 %s43, %s44
          %844 = vsyncadd %s820, 0
          %s845 = smul.addr %s842, 8
          %s846 = scalar_lea.hbm %s8, %s845
          %s848 = sshll.u32 %s823, 4
          %s849 = int_to_ptr.vmem [resolvable:$true] %s848
          %s850 = sshll.u32 %s846, 4
          %s851 = int_to_ptr.hbm [resolvable:$true] %s850
          %853 = dma.vmem_to_hbm [thread:$0]  %s849, 128, %s851, %s820
        $region344: #{tpu_custom_call.1} parent=35 // pred_fallthru
          _
      $region36: #{tpu_custom_call.1} parent=5 // pred_fallthru
        _
      %p854 = scmp.le.s32.totalorder 2, %s34
      // Predicated region
      $region345: #{tpu_custom_call.1} parent=5 // pred_check
        %p855 = pneg %p854
      $region346: #{tpu_custom_call.1} parent=5 // pred_check_branch
        %857 = sbr.rel (%p855) target = $region348
      $region347: #{tpu_custom_call.1} parent=5 // pred_region
        %s858 = ssub.s32 %s34, 2
        // Predicated region
        $region349: #{tpu_custom_call.1} parent=347 // pred_check
          %p859 = pneg %p175
        $region350: #{tpu_custom_call.1} parent=347 // pred_check_branch
          %861 = sbr.rel (%p859) target = $region352
        $region351: #{tpu_custom_call.1} parent=347 // pred_region
          %s862 = sand.u32 %s160, 1
          %s863 = scalar_lea.sflag [#allocation9], %s862
          %s864 = sand.u32 %s160, 1
          %s865 = smul.addr %s864, 8
          %s866 = scalar_lea.vmem [#allocation8], %s865
          %868 = dma.done %s863, 128
        $region352: #{tpu_custom_call.1} parent=347 // pred_fallthru
          _
        // Predicated region
        $region353: #{tpu_custom_call.1} parent=347 // pred_check
          %p869 = pneg %p203
        $region354: #{tpu_custom_call.1} parent=347 // pred_check_branch
          %871 = sbr.rel (%p869) target = $region356
        $region355: #{tpu_custom_call.1} parent=347 // pred_region
          %s872 = sand.u32 %s188, 1
          %s873 = scalar_lea.sflag [#allocation11], %s872
          %s874 = sand.u32 %s188, 1
          %s875 = smul.addr %s874, 8
          %s876 = scalar_lea.vmem [#allocation10], %s875
          %878 = dma.done %s873, 128
        $region356: #{tpu_custom_call.1} parent=347 // pred_fallthru
          _
      $region348: #{tpu_custom_call.1} parent=5 // pred_fallthru
        _
    $region6: #{tpu_custom_call.1} parent=1 // loop_footer
      %s38 = sadd.s32 1, %s34
    $region7: #{tpu_custom_call.1} parent=1 // loop_footer_branch
      %33 = sbr.rel target = $region3
    $region8: #{tpu_custom_call.1} parent=1 // loop_exit
      _
    %879 = vsyncpa [#allocation9], 1
    %s880 = scalar_lea.sflag [#allocation9], 1
    %881 = vsyncpa %s880, 1
    %882 = vsyncpa [#allocation11], 1
    %s883 = scalar_lea.sflag [#allocation11], 1
    %884 = vsyncpa %s883, 1
  %885 = vsyncmov [#allocation4]
  %s886 = vpop.sfrf %885
  %p887 = scmp.eq.s32.totalorder %s886, 0
  %p888 = pneg %p887
  %890 = shalt.err (%p888)
  %s891 = scalar_lea.sflag [#allocation4], 1
  %892 = vsyncmov %s891
  %s893 = vpop.sfrf %892
  %p894 = scmp.eq.s32.totalorder %s893, 0
  %p895 = pneg %p894
  %897 = shalt.err (%p895)
  %s898 = scalar_lea.sflag [#allocation4], 2
  %899 = vsyncmov %s898
  %s900 = vpop.sfrf %899
  %p901 = scmp.eq.s32.totalorder %s900, 0
  %p902 = pneg %p901
  %904 = shalt.err (%p902)
  %s905 = scalar_lea.sflag [#allocation4], 3
  %906 = vsyncmov %s905
  %s907 = vpop.sfrf %906
  %p908 = scmp.eq.s32.totalorder %s907, 0
  %p909 = pneg %p908
  %911 = shalt.err (%p909)
  %s912 = scalar_lea.sflag [#allocation4], 4
  %913 = vsyncmov %s912
  %s914 = vpop.sfrf %913
  %p915 = scmp.eq.s32.totalorder %s914, 0
  %p916 = pneg %p915
  %918 = shalt.err (%p916)
  %s919 = scalar_lea.sflag [#allocation4], 5
  %920 = vsyncmov %s919
  %s921 = vpop.sfrf %920
  %p922 = scmp.eq.s32.totalorder %s921, 0
  %p923 = pneg %p922
  %925 = shalt.err (%p923)
  %s926 = scalar_lea.sflag [#allocation4], 6
  %927 = vsyncmov %s926
  %s928 = vpop.sfrf %927
  %p929 = scmp.eq.s32.totalorder %s928, 0
  %p930 = pneg %p929
  %932 = shalt.err (%p930)
  %s933 = scalar_lea.sflag [#allocation4], 7
  %934 = vsyncmov %s933
  %s935 = vpop.sfrf %934
  %p936 = scmp.eq.s32.totalorder %s935, 0
  %p937 = pneg %p936
  %939 = shalt.err (%p937)
  %s940 = scalar_lea.sflag [#allocation4], 8
  %941 = vsyncmov %s940
  %s942 = vpop.sfrf %941
  %p943 = scmp.eq.s32.totalorder %s942, 0
  %p944 = pneg %p943
  %946 = shalt.err (%p944)
  %s947 = scalar_lea.sflag [#allocation4], 9
  %948 = vsyncmov %s947
  %s949 = vpop.sfrf %948
  %p950 = scmp.eq.s32.totalorder %s949, 0
  %p951 = pneg %p950
  %953 = shalt.err (%p951)

</llo_original>
